<compile_context>
chip_gen: v6e
topology: v6e:2x2x1
jax: 0.10.0
libtpu: 0.0.40
codegen_flags: <defaults>
</compile_context>

<pallas_src>
import jax
import jax.numpy as jnp
import numpy as np
from jax.experimental import pallas as pl
from jax.experimental.pallas import tpu as pltpu


# --------------------------- in-kernel building blocks --------------------------- #

def _conv3x3_same_relu(x, w_ref, b_ref):
    """3x3 SAME conv + bias + ReLU on a lane-dense single-image slab.

    x:     (H, W*Cin) value, lane order (w, cin).
    w_ref: (3, W*Cin, W*Cout) prepacked banded weights, one matrix per kh tap.
           kw taps + W-direction zero padding are folded into the band structure,
           so the conv is exactly three MXU matmuls (no im2col, no concat).
    b_ref: (1, W*Cout) bias tiled across w.
    """
    zero_row = jnp.zeros((1, x.shape[1]), jnp.float32)
    # kh taps as sublane shifts with explicit zero padding (no wrap, no masks).
    up = jnp.concatenate([zero_row, x[:-1, :]], axis=0)   # row h holds input row h-1
    dn = jnp.concatenate([x[1:, :], zero_row], axis=0)    # row h holds input row h+1

    y = (jnp.dot(up, w_ref[0], preferred_element_type=jnp.float32)
         + jnp.dot(x, w_ref[1], preferred_element_type=jnp.float32)
         + jnp.dot(dn, w_ref[2], preferred_element_type=jnp.float32)
         + b_ref[...])
    return jnp.maximum(y, 0.0)


def _maxpool2x2(y):
    """2x2 / stride-2 max-pool of a lane-dense slab whose lanes were pre-permuted
    (in the packed weights of the preceding conv) into [even-w | odd-w] halves.

    y: (H, W*C) -> (H//2, (W//2)*C); output lanes are back in natural (w', c) order.
    """
    H, L = y.shape
    half = L // 2
    p = jnp.maximum(y[:, :half], y[:, half:])        # pool along W: aligned half max
    p = p.reshape(H // 2, 2, half)
    return jnp.maximum(p[:, 0, :], p[:, 1, :])       # pool along H: row-pair max


# ------------------------------------ kernel ------------------------------------ #

def tinyvgg_kernel(x_ref, w1_ref, b1_ref, w2_ref, b2_ref,
                   w3_ref, b3_ref, w4_ref, b4_ref, wl_ref, bl_ref, o_ref):
    x = x_ref[0]                                      # (H, W*Cin)

    # conv_block_1
    x = _conv3x3_same_relu(x, w1_ref, b1_ref)         # (H, W*Ch), natural lane order
    x = _conv3x3_same_relu(x, w2_ref, b2_ref)         # even/odd-w permuted lanes
    x = _maxpool2x2(x)                                # (H/2, (W/2)*Ch)

    # conv_block_2
    x = _conv3x3_same_relu(x, w3_ref, b3_ref)
    x = _conv3x3_same_relu(x, w4_ref, b4_ref)         # even/odd-w permuted lanes
    x = _maxpool2x2(x)                                # (H/4, (W/4)*Ch)

    # classifier: Linear weight is prepacked to (H2, W2*Ch, out) in (h, w, c)
    # order, matching the pooled slab, so no flatten relayout is needed.
    h2 = x.shape[0]
    acc = bl_ref[...]                                 # (1, out)
    for h in range(h2):
        acc = acc + jnp.dot(x[h:h + 1, :], wl_ref[h],
                            preferred_element_type=jnp.float32)
    o_ref[0] = acc


# --------------------------- one-time parameter prepack -------------------------- #

def _banded_conv_weights(w_hwio, width, even_odd_out):
    """Fold a (3,3,Ci,Co) HWIO conv weight into 3 banded (W*Ci, W*Co) matrices,
    one per kh tap.  Block (w_in*Ci.., w*Co..) holds the (kh, kw) kernel slice
    when w_in == w + kw - 1; out-of-range taps (SAME zero padding along W) are
    simply omitted.  If even_odd_out, output columns are permuted to
    [all even w | all odd w] so the following 2x2 max-pool becomes one aligned
    half-slab max with the result back in natural (w', c) order."""
    w_hwio = np.asarray(w_hwio, np.float32)
    _, _, ci, co = w_hwio.shape
    mats = np.zeros((3, width * ci, width * co), np.float32)
    for kh in range(3):
        for kw in range(3):
            for w in range(width):
                wi = w + kw - 1
                if 0 <= wi < width:
                    mats[kh, wi * ci:(wi + 1) * ci, w * co:(w + 1) * co] = w_hwio[kh, kw]
    if even_odd_out:
        cols = np.arange(width * co).reshape(width, co)
        perm = np.concatenate([cols[0::2].ravel(), cols[1::2].ravel()])
        mats = mats[:, :, perm]
    return jnp.asarray(mats)


def _bias_row(b, width):
    # Bias tiled across w (independent of the even/odd lane permutation).
    return jnp.asarray(np.tile(np.asarray(b, np.float32), width)[None, :])


def prepack_params(params, image_size):
    """One-time repack of TinyVGG params into the kernel layout (hoisted out of
    the per-call jitted path per the performance review)."""
    H = W = image_size
    hid = params["w1"].shape[3]
    out_dim = params["wl"].shape[1]
    h2 = w2 = image_size // 4
    # torch flatten order of the Linear rows is (c, h, w); kernel wants (h, (w, c)).
    wl = np.asarray(params["wl"], np.float32)
    wl = (wl.reshape(hid, h2, w2, out_dim).transpose(1, 2, 0, 3)
            .reshape(h2, w2 * hid, out_dim))
    return {
        "w1": _banded_conv_weights(params["w1"], W, even_odd_out=False),
        "b1": _bias_row(params["b1"], W),
        "w2": _banded_conv_weights(params["w2"], W, even_odd_out=True),
        "b2": _bias_row(params["b2"], W),
        "w3": _banded_conv_weights(params["w3"], W // 2, even_odd_out=False),
        "b3": _bias_row(params["b3"], W // 2),
        "w4": _banded_conv_weights(params["w4"], W // 2, even_odd_out=True),
        "b4": _bias_row(params["b4"], W // 2),
        "wl": jnp.asarray(wl),
        "bl": jnp.asarray(np.asarray(params["bl"], np.float32)[None, :]),
    }


# ----------------------------------- wrapper ------------------------------------ #

@jax.jit
def tinyvgg_forward(x_nchw, packed):
    N, Cin, H, W = x_nchw.shape
    out_dim = packed["bl"].shape[1]
    # NCHW -> per-image lane-dense (H, W*Cin) slabs.
    x = jnp.transpose(x_nchw, (0, 2, 3, 1)).astype(jnp.float32).reshape(N, H, W * Cin)

    def whole(a):
        nd = a.ndim
        return pl.BlockSpec(a.shape, lambda i: (0,) * nd)

    weights = (packed["w1"], packed["b1"], packed["w2"], packed["b2"],
               packed["w3"], packed["b3"], packed["w4"], packed["b4"],
               packed["wl"], packed["bl"])

    out = pl.pallas_call(
        tinyvgg_kernel,
        out_shape=jax.ShapeDtypeStruct((N, 1, out_dim), jnp.float32),
        grid=(N,),
        in_specs=[pl.BlockSpec((1, H, W * Cin), lambda i: (i, 0, 0))]
                 + [whole(a) for a in weights],
        out_specs=pl.BlockSpec((1, 1, out_dim), lambda i: (i, 0, 0)),
        compiler_params=pltpu.CompilerParams(
            dimension_semantics=("parallel",)),
    )(x, *weights)
    return out.reshape(N, out_dim)


# ------------------------ pure-JAX reference (unpacked params) ------------------- #

def ref_forward(x_nchw, params):
    x = jnp.transpose(x_nchw, (0, 2, 3, 1)).astype(jnp.float32)

    def conv(x, w, b):
        y = jax.lax.conv_general_dilated(
            x, w, window_strides=(1, 1), padding="SAME",
            dimension_numbers=("NHWC", "HWIO", "NHWC"))
        return jax.nn.relu(y + b)

    def pool(x):
        return jax.lax.reduce_window(x, -jnp.inf, jax.lax.max,
                                     (1, 2, 2, 1), (1, 2, 2, 1), "VALID")

    x = pool(conv(conv(x, params["w1"], params["b1"]), params["w2"], params["b2"]))
    x = pool(conv(conv(x, params["w3"], params["b3"]), params["w4"], params["b4"]))
    N = x.shape[0]
    x_flat = jnp.transpose(x, (0, 3, 1, 2)).reshape(N, -1)   # torch NCHW flatten
    return x_flat @ params["wl"] + params["bl"]


# ------------------------------------- main -------------------------------------- #

if __name__ == "__main__":
    # TinyVGG(input_shape=4, hidden_units=8, output_shape=3, input_image_size=16)
    N, Cin, H, W = 2, 4, 16, 16
    hidden, out_dim = 8, 3
    conv_out = H // 4                        # two 2x2 maxpools: 16 -> 4
    feat = hidden * conv_out * conv_out      # 128

    key = jax.random.PRNGKey(0)
    ks = jax.random.split(key, 11)

    def init_w(k, shape, scale=0.1):
        return (scale * jax.random.normal(k, shape)).astype(jnp.float32)

    params = {
        # conv weights in HWIO layout (torch's (Cout,Cin,kh,kw) -> permute(2,3,1,0)).
        "w1": init_w(ks[0], (3, 3, Cin, hidden)),
        "b1": init_w(ks[1], (hidden,)),
        "w2": init_w(ks[2], (3, 3, hidden, hidden)),
        "b2": init_w(ks[3], (hidden,)),
        "w3": init_w(ks[4], (3, 3, hidden, hidden)),
        "b3": init_w(ks[5], (hidden,)),
        "w4": init_w(ks[6], (3, 3, hidden, hidden)),
        "b4": init_w(ks[7], (hidden,)),
        # linear weight (in_features, out_features); rows in torch flatten (c,h,w) order.
        "wl": init_w(ks[8], (feat, out_dim)),
        "bl": init_w(ks[9], (out_dim,)),
    }

    x = jax.random.normal(ks[10], (N, Cin, H, W), dtype=jnp.float32)

    packed = prepack_params(params, image_size=H)     # one-time, outside the hot path
    out = jax.block_until_ready(tinyvgg_forward(x, packed))
    ref = jax.block_until_ready(ref_forward(x, params))

    assert out.shape == (N, out_dim)
    np.testing.assert_allclose(np.asarray(out), np.asarray(ref),
                               rtol=1e-4, atol=1e-4)

    print("KERNEL_OK")
</pallas_src>

<mosaic_0001>
module attributes {stable_mosaic.version = 11 : i64} {
  func.func @tinyvgg_kernel(%arg0: i32, %arg1: memref<1x16x64xf32, #tpu.memory_space<vmem>>, %arg2: memref<3x64x128xf32, #tpu.memory_space<vmem>>, %arg3: memref<1x128xf32, #tpu.memory_space<vmem>>, %arg4: memref<3x128x128xf32, #tpu.memory_space<vmem>>, %arg5: memref<1x128xf32, #tpu.memory_space<vmem>>, %arg6: memref<3x64x64xf32, #tpu.memory_space<vmem>>, %arg7: memref<1x64xf32, #tpu.memory_space<vmem>>, %arg8: memref<3x64x64xf32, #tpu.memory_space<vmem>>, %arg9: memref<1x64xf32, #tpu.memory_space<vmem>>, %arg10: memref<4x32x3xf32, #tpu.memory_space<vmem>>, %arg11: memref<1x3xf32, #tpu.memory_space<vmem>>, %arg12: memref<1x1x3xf32, #tpu.memory_space<vmem>>) attributes {dimension_semantics = [#tpu.dimension_semantics<parallel>], iteration_bounds = array<i64: 2>, scalar_prefetch = 0 : i64, scratch_operands = 0 : i64, tpu.core_type = #tpu.core_type<tc>, window_params = [{transform_indices = @transform_0, window_bounds = array<i64: 1, 16, 64>}, {pipeline_mode = #tpu.pipeline_mode<synchronous>, transform_indices = @transform_1, window_bounds = array<i64: 3, 64, 128>}, {pipeline_mode = #tpu.pipeline_mode<synchronous>, transform_indices = @transform_2, window_bounds = array<i64: 1, 128>}, {pipeline_mode = #tpu.pipeline_mode<synchronous>, transform_indices = @transform_3, window_bounds = array<i64: 3, 128, 128>}, {pipeline_mode = #tpu.pipeline_mode<synchronous>, transform_indices = @transform_4, window_bounds = array<i64: 1, 128>}, {pipeline_mode = #tpu.pipeline_mode<synchronous>, transform_indices = @transform_5, window_bounds = array<i64: 3, 64, 64>}, {pipeline_mode = #tpu.pipeline_mode<synchronous>, transform_indices = @transform_6, window_bounds = array<i64: 1, 64>}, {pipeline_mode = #tpu.pipeline_mode<synchronous>, transform_indices = @transform_7, window_bounds = array<i64: 3, 64, 64>}, {pipeline_mode = #tpu.pipeline_mode<synchronous>, transform_indices = @transform_8, window_bounds = array<i64: 1, 64>}, {pipeline_mode = #tpu.pipeline_mode<synchronous>, transform_indices = @transform_9, window_bounds = array<i64: 4, 32, 3>}, {pipeline_mode = #tpu.pipeline_mode<synchronous>, transform_indices = @transform_10, window_bounds = array<i64: 1, 3>}, {transform_indices = @transform_11, window_bounds = array<i64: 1, 1, 3>}]} {
    %c0 = arith.constant 0 : index
    %c0_0 = arith.constant 0 : index
    %c0_1 = arith.constant 0 : index
    %0 = vector.load %arg1[%c0, %c0_0, %c0_1] : memref<1x16x64xf32, #tpu.memory_space<vmem>>, vector<1x16x64xf32>
    %1 = vector.shape_cast %0 : vector<1x16x64xf32> to vector<16x64xf32>
    %cst = arith.constant 0.000000e+00 : f32
    %2 = vector.broadcast %cst : f32 to vector<1x64xf32>
    %3 = vector.extract_strided_slice %1 {offsets = [0, 0], sizes = [15, 64], strides = [1, 1]} : vector<16x64xf32> to vector<15x64xf32>
    %4 = tpu.concatenate %2, %3 in 0 : vector<1x64xf32>, vector<15x64xf32> -> vector<16x64xf32>
    %5 = vector.extract_strided_slice %1 {offsets = [1, 0], sizes = [15, 64], strides = [1, 1]} : vector<16x64xf32> to vector<15x64xf32>
    %6 = tpu.concatenate %5, %2 in 0 : vector<15x64xf32>, vector<1x64xf32> -> vector<16x64xf32>
    %c0_2 = arith.constant 0 : index
    %c0_3 = arith.constant 0 : index
    %c0_4 = arith.constant 0 : index
    %7 = vector.load %arg2[%c0_2, %c0_3, %c0_4] : memref<3x64x128xf32, #tpu.memory_space<vmem>>, vector<1x64x128xf32>
    %8 = vector.shape_cast %7 : vector<1x64x128xf32> to vector<64x128xf32>
    %cst_5 = arith.constant dense<0.000000e+00> : vector<16x128xf32>
    %9 = tpu.matmul %4, %8, %cst_5 {dimension_numbers = #tpu.dot_dimension_numbers<[1], [0], [0], [1], [0, 0, 1, 1], [], []>} : vector<16x64xf32>, vector<64x128xf32>, vector<16x128xf32> -> vector<16x128xf32>
    %c1 = arith.constant 1 : index
    %c0_6 = arith.constant 0 : index
    %c0_7 = arith.constant 0 : index
    %10 = vector.load %arg2[%c1, %c0_6, %c0_7] : memref<3x64x128xf32, #tpu.memory_space<vmem>>, vector<1x64x128xf32>
    %11 = vector.shape_cast %10 : vector<1x64x128xf32> to vector<64x128xf32>
    %cst_8 = arith.constant dense<0.000000e+00> : vector<16x128xf32>
    %12 = tpu.matmul %1, %11, %cst_8 {dimension_numbers = #tpu.dot_dimension_numbers<[1], [0], [0], [1], [0, 0, 1, 1], [], []>} : vector<16x64xf32>, vector<64x128xf32>, vector<16x128xf32> -> vector<16x128xf32>
    %13 = arith.addf %9, %12 : vector<16x128xf32>
    %c2 = arith.constant 2 : index
    %c0_9 = arith.constant 0 : index
    %c0_10 = arith.constant 0 : index
    %14 = vector.load %arg2[%c2, %c0_9, %c0_10] : memref<3x64x128xf32, #tpu.memory_space<vmem>>, vector<1x64x128xf32>
    %15 = vector.shape_cast %14 : vector<1x64x128xf32> to vector<64x128xf32>
    %cst_11 = arith.constant dense<0.000000e+00> : vector<16x128xf32>
    %16 = tpu.matmul %6, %15, %cst_11 {dimension_numbers = #tpu.dot_dimension_numbers<[1], [0], [0], [1], [0, 0, 1, 1], [], []>} : vector<16x64xf32>, vector<64x128xf32>, vector<16x128xf32> -> vector<16x128xf32>
    %17 = arith.addf %13, %16 : vector<16x128xf32>
    %c0_12 = arith.constant 0 : index
    %c0_13 = arith.constant 0 : index
    %18 = vector.load %arg3[%c0_12, %c0_13] : memref<1x128xf32, #tpu.memory_space<vmem>>, vector<1x128xf32>
    %19 = vector.broadcast %18 : vector<1x128xf32> to vector<16x128xf32>
    %20 = arith.addf %17, %19 : vector<16x128xf32>
    %cst_14 = arith.constant 0.000000e+00 : f32
    %21 = vector.broadcast %cst_14 : f32 to vector<16x128xf32>
    %22 = arith.maximumf %20, %21 : vector<16x128xf32>
    %cst_15 = arith.constant 0.000000e+00 : f32
    %23 = vector.broadcast %cst_15 : f32 to vector<1x128xf32>
    %24 = vector.extract_strided_slice %22 {offsets = [0, 0], sizes = [15, 128], strides = [1, 1]} : vector<16x128xf32> to vector<15x128xf32>
    %25 = tpu.concatenate %23, %24 in 0 : vector<1x128xf32>, vector<15x128xf32> -> vector<16x128xf32>
    %26 = vector.extract_strided_slice %22 {offsets = [1, 0], sizes = [15, 128], strides = [1, 1]} : vector<16x128xf32> to vector<15x128xf32>
    %27 = tpu.concatenate %26, %23 in 0 : vector<15x128xf32>, vector<1x128xf32> -> vector<16x128xf32>
    %c0_16 = arith.constant 0 : index
    %c0_17 = arith.constant 0 : index
    %c0_18 = arith.constant 0 : index
    %28 = vector.load %arg4[%c0_16, %c0_17, %c0_18] : memref<3x128x128xf32, #tpu.memory_space<vmem>>, vector<1x128x128xf32>
    %29 = vector.shape_cast %28 : vector<1x128x128xf32> to vector<128x128xf32>
    %cst_19 = arith.constant dense<0.000000e+00> : vector<16x128xf32>
    %30 = tpu.matmul %25, %29, %cst_19 {dimension_numbers = #tpu.dot_dimension_numbers<[1], [0], [0], [1], [0, 0, 1, 1], [], []>} : vector<16x128xf32>, vector<128x128xf32>, vector<16x128xf32> -> vector<16x128xf32>
    %c1_20 = arith.constant 1 : index
    %c0_21 = arith.constant 0 : index
    %c0_22 = arith.constant 0 : index
    %31 = vector.load %arg4[%c1_20, %c0_21, %c0_22] : memref<3x128x128xf32, #tpu.memory_space<vmem>>, vector<1x128x128xf32>
    %32 = vector.shape_cast %31 : vector<1x128x128xf32> to vector<128x128xf32>
    %cst_23 = arith.constant dense<0.000000e+00> : vector<16x128xf32>
    %33 = tpu.matmul %22, %32, %cst_23 {dimension_numbers = #tpu.dot_dimension_numbers<[1], [0], [0], [1], [0, 0, 1, 1], [], []>} : vector<16x128xf32>, vector<128x128xf32>, vector<16x128xf32> -> vector<16x128xf32>
    %34 = arith.addf %30, %33 : vector<16x128xf32>
    %c2_24 = arith.constant 2 : index
    %c0_25 = arith.constant 0 : index
    %c0_26 = arith.constant 0 : index
    %35 = vector.load %arg4[%c2_24, %c0_25, %c0_26] : memref<3x128x128xf32, #tpu.memory_space<vmem>>, vector<1x128x128xf32>
    %36 = vector.shape_cast %35 : vector<1x128x128xf32> to vector<128x128xf32>
    %cst_27 = arith.constant dense<0.000000e+00> : vector<16x128xf32>
    %37 = tpu.matmul %27, %36, %cst_27 {dimension_numbers = #tpu.dot_dimension_numbers<[1], [0], [0], [1], [0, 0, 1, 1], [], []>} : vector<16x128xf32>, vector<128x128xf32>, vector<16x128xf32> -> vector<16x128xf32>
    %38 = arith.addf %34, %37 : vector<16x128xf32>
    %c0_28 = arith.constant 0 : index
    %c0_29 = arith.constant 0 : index
    %39 = vector.load %arg5[%c0_28, %c0_29] : memref<1x128xf32, #tpu.memory_space<vmem>>, vector<1x128xf32>
    %40 = vector.broadcast %39 : vector<1x128xf32> to vector<16x128xf32>
    %41 = arith.addf %38, %40 : vector<16x128xf32>
    %cst_30 = arith.constant 0.000000e+00 : f32
    %42 = vector.broadcast %cst_30 : f32 to vector<16x128xf32>
    %43 = arith.maximumf %41, %42 : vector<16x128xf32>
    %44 = vector.extract_strided_slice %43 {offsets = [0, 0], sizes = [16, 64], strides = [1, 1]} : vector<16x128xf32> to vector<16x64xf32>
    %45 = vector.extract_strided_slice %43 {offsets = [0, 64], sizes = [16, 64], strides = [1, 1]} : vector<16x128xf32> to vector<16x64xf32>
    %46 = arith.maximumf %44, %45 : vector<16x64xf32>
    %47 = vector.shape_cast %46 : vector<16x64xf32> to vector<8x2x64xf32>
    %48 = vector.extract_strided_slice %47 {offsets = [0, 0, 0], sizes = [8, 1, 64], strides = [1, 1, 1]} : vector<8x2x64xf32> to vector<8x1x64xf32>
    %49 = vector.shape_cast %48 : vector<8x1x64xf32> to vector<8x64xf32>
    %50 = vector.extract_strided_slice %47 {offsets = [0, 1, 0], sizes = [8, 1, 64], strides = [1, 1, 1]} : vector<8x2x64xf32> to vector<8x1x64xf32>
    %51 = vector.shape_cast %50 : vector<8x1x64xf32> to vector<8x64xf32>
    %52 = arith.maximumf %49, %51 : vector<8x64xf32>
    %cst_31 = arith.constant 0.000000e+00 : f32
    %53 = vector.broadcast %cst_31 : f32 to vector<1x64xf32>
    %54 = vector.extract_strided_slice %52 {offsets = [0, 0], sizes = [7, 64], strides = [1, 1]} : vector<8x64xf32> to vector<7x64xf32>
    %55 = tpu.concatenate %53, %54 in 0 : vector<1x64xf32>, vector<7x64xf32> -> vector<8x64xf32>
    %56 = vector.extract_strided_slice %52 {offsets = [1, 0], sizes = [7, 64], strides = [1, 1]} : vector<8x64xf32> to vector<7x64xf32>
    %57 = tpu.concatenate %56, %53 in 0 : vector<7x64xf32>, vector<1x64xf32> -> vector<8x64xf32>
    %c0_32 = arith.constant 0 : index
    %c0_33 = arith.constant 0 : index
    %c0_34 = arith.constant 0 : index
    %58 = vector.load %arg6[%c0_32, %c0_33, %c0_34] : memref<3x64x64xf32, #tpu.memory_space<vmem>>, vector<1x64x64xf32>
    %59 = vector.shape_cast %58 : vector<1x64x64xf32> to vector<64x64xf32>
    %cst_35 = arith.constant dense<0.000000e+00> : vector<8x64xf32>
    %60 = tpu.matmul %55, %59, %cst_35 {dimension_numbers = #tpu.dot_dimension_numbers<[1], [0], [0], [1], [0, 0, 1, 1], [], []>} : vector<8x64xf32>, vector<64x64xf32>, vector<8x64xf32> -> vector<8x64xf32>
    %c1_36 = arith.constant 1 : index
    %c0_37 = arith.constant 0 : index
    %c0_38 = arith.constant 0 : index
    %61 = vector.load %arg6[%c1_36, %c0_37, %c0_38] : memref<3x64x64xf32, #tpu.memory_space<vmem>>, vector<1x64x64xf32>
    %62 = vector.shape_cast %61 : vector<1x64x64xf32> to vector<64x64xf32>
    %cst_39 = arith.constant dense<0.000000e+00> : vector<8x64xf32>
    %63 = tpu.matmul %52, %62, %cst_39 {dimension_numbers = #tpu.dot_dimension_numbers<[1], [0], [0], [1], [0, 0, 1, 1], [], []>} : vector<8x64xf32>, vector<64x64xf32>, vector<8x64xf32> -> vector<8x64xf32>
    %64 = arith.addf %60, %63 : vector<8x64xf32>
    %c2_40 = arith.constant 2 : index
    %c0_41 = arith.constant 0 : index
    %c0_42 = arith.constant 0 : index
    %65 = vector.load %arg6[%c2_40, %c0_41, %c0_42] : memref<3x64x64xf32, #tpu.memory_space<vmem>>, vector<1x64x64xf32>
    %66 = vector.shape_cast %65 : vector<1x64x64xf32> to vector<64x64xf32>
    %cst_43 = arith.constant dense<0.000000e+00> : vector<8x64xf32>
    %67 = tpu.matmul %57, %66, %cst_43 {dimension_numbers = #tpu.dot_dimension_numbers<[1], [0], [0], [1], [0, 0, 1, 1], [], []>} : vector<8x64xf32>, vector<64x64xf32>, vector<8x64xf32> -> vector<8x64xf32>
    %68 = arith.addf %64, %67 : vector<8x64xf32>
    %c0_44 = arith.constant 0 : index
    %c0_45 = arith.constant 0 : index
    %69 = vector.load %arg7[%c0_44, %c0_45] : memref<1x64xf32, #tpu.memory_space<vmem>>, vector<1x64xf32>
    %70 = vector.broadcast %69 : vector<1x64xf32> to vector<8x64xf32>
    %71 = arith.addf %68, %70 : vector<8x64xf32>
    %cst_46 = arith.constant 0.000000e+00 : f32
    %72 = vector.broadcast %cst_46 : f32 to vector<8x64xf32>
    %73 = arith.maximumf %71, %72 : vector<8x64xf32>
    %cst_47 = arith.constant 0.000000e+00 : f32
    %74 = vector.broadcast %cst_47 : f32 to vector<1x64xf32>
    %75 = vector.extract_strided_slice %73 {offsets = [0, 0], sizes = [7, 64], strides = [1, 1]} : vector<8x64xf32> to vector<7x64xf32>
    %76 = tpu.concatenate %74, %75 in 0 : vector<1x64xf32>, vector<7x64xf32> -> vector<8x64xf32>
    %77 = vector.extract_strided_slice %73 {offsets = [1, 0], sizes = [7, 64], strides = [1, 1]} : vector<8x64xf32> to vector<7x64xf32>
    %78 = tpu.concatenate %77, %74 in 0 : vector<7x64xf32>, vector<1x64xf32> -> vector<8x64xf32>
    %c0_48 = arith.constant 0 : index
    %c0_49 = arith.constant 0 : index
    %c0_50 = arith.constant 0 : index
    %79 = vector.load %arg8[%c0_48, %c0_49, %c0_50] : memref<3x64x64xf32, #tpu.memory_space<vmem>>, vector<1x64x64xf32>
    %80 = vector.shape_cast %79 : vector<1x64x64xf32> to vector<64x64xf32>
    %cst_51 = arith.constant dense<0.000000e+00> : vector<8x64xf32>
    %81 = tpu.matmul %76, %80, %cst_51 {dimension_numbers = #tpu.dot_dimension_numbers<[1], [0], [0], [1], [0, 0, 1, 1], [], []>} : vector<8x64xf32>, vector<64x64xf32>, vector<8x64xf32> -> vector<8x64xf32>
    %c1_52 = arith.constant 1 : index
    %c0_53 = arith.constant 0 : index
    %c0_54 = arith.constant 0 : index
    %82 = vector.load %arg8[%c1_52, %c0_53, %c0_54] : memref<3x64x64xf32, #tpu.memory_space<vmem>>, vector<1x64x64xf32>
    %83 = vector.shape_cast %82 : vector<1x64x64xf32> to vector<64x64xf32>
    %cst_55 = arith.constant dense<0.000000e+00> : vector<8x64xf32>
    %84 = tpu.matmul %73, %83, %cst_55 {dimension_numbers = #tpu.dot_dimension_numbers<[1], [0], [0], [1], [0, 0, 1, 1], [], []>} : vector<8x64xf32>, vector<64x64xf32>, vector<8x64xf32> -> vector<8x64xf32>
    %85 = arith.addf %81, %84 : vector<8x64xf32>
    %c2_56 = arith.constant 2 : index
    %c0_57 = arith.constant 0 : index
    %c0_58 = arith.constant 0 : index
    %86 = vector.load %arg8[%c2_56, %c0_57, %c0_58] : memref<3x64x64xf32, #tpu.memory_space<vmem>>, vector<1x64x64xf32>
    %87 = vector.shape_cast %86 : vector<1x64x64xf32> to vector<64x64xf32>
    %cst_59 = arith.constant dense<0.000000e+00> : vector<8x64xf32>
    %88 = tpu.matmul %78, %87, %cst_59 {dimension_numbers = #tpu.dot_dimension_numbers<[1], [0], [0], [1], [0, 0, 1, 1], [], []>} : vector<8x64xf32>, vector<64x64xf32>, vector<8x64xf32> -> vector<8x64xf32>
    %89 = arith.addf %85, %88 : vector<8x64xf32>
    %c0_60 = arith.constant 0 : index
    %c0_61 = arith.constant 0 : index
    %90 = vector.load %arg9[%c0_60, %c0_61] : memref<1x64xf32, #tpu.memory_space<vmem>>, vector<1x64xf32>
    %91 = vector.broadcast %90 : vector<1x64xf32> to vector<8x64xf32>
    %92 = arith.addf %89, %91 : vector<8x64xf32>
    %cst_62 = arith.constant 0.000000e+00 : f32
    %93 = vector.broadcast %cst_62 : f32 to vector<8x64xf32>
    %94 = arith.maximumf %92, %93 : vector<8x64xf32>
    %95 = vector.extract_strided_slice %94 {offsets = [0, 0], sizes = [8, 32], strides = [1, 1]} : vector<8x64xf32> to vector<8x32xf32>
    %96 = vector.extract_strided_slice %94 {offsets = [0, 32], sizes = [8, 32], strides = [1, 1]} : vector<8x64xf32> to vector<8x32xf32>
    %97 = arith.maximumf %95, %96 : vector<8x32xf32>
    %98 = vector.shape_cast %97 : vector<8x32xf32> to vector<4x2x32xf32>
    %99 = vector.extract_strided_slice %98 {offsets = [0, 0, 0], sizes = [4, 1, 32], strides = [1, 1, 1]} : vector<4x2x32xf32> to vector<4x1x32xf32>
    %100 = vector.shape_cast %99 : vector<4x1x32xf32> to vector<4x32xf32>
    %101 = vector.extract_strided_slice %98 {offsets = [0, 1, 0], sizes = [4, 1, 32], strides = [1, 1, 1]} : vector<4x2x32xf32> to vector<4x1x32xf32>
    %102 = vector.shape_cast %101 : vector<4x1x32xf32> to vector<4x32xf32>
    %103 = arith.maximumf %100, %102 : vector<4x32xf32>
    %c0_63 = arith.constant 0 : index
    %c0_64 = arith.constant 0 : index
    %104 = vector.load %arg11[%c0_63, %c0_64] : memref<1x3xf32, #tpu.memory_space<vmem>>, vector<1x3xf32>
    %105 = vector.extract_strided_slice %103 {offsets = [0, 0], sizes = [1, 32], strides = [1, 1]} : vector<4x32xf32> to vector<1x32xf32>
    %c0_65 = arith.constant 0 : index
    %c0_66 = arith.constant 0 : index
    %c0_67 = arith.constant 0 : index
    %106 = vector.load %arg10[%c0_65, %c0_66, %c0_67] : memref<4x32x3xf32, #tpu.memory_space<vmem>>, vector<1x32x3xf32>
    %107 = vector.shape_cast %106 : vector<1x32x3xf32> to vector<32x3xf32>
    %cst_68 = arith.constant dense<0.000000e+00> : vector<1x3xf32>
    %108 = tpu.matmul %105, %107, %cst_68 {dimension_numbers = #tpu.dot_dimension_numbers<[1], [0], [0], [1], [0, 0, 1, 1], [], []>} : vector<1x32xf32>, vector<32x3xf32>, vector<1x3xf32> -> vector<1x3xf32>
    %109 = arith.addf %104, %108 : vector<1x3xf32>
    %110 = vector.extract_strided_slice %103 {offsets = [1, 0], sizes = [1, 32], strides = [1, 1]} : vector<4x32xf32> to vector<1x32xf32>
    %c1_69 = arith.constant 1 : index
    %c0_70 = arith.constant 0 : index
    %c0_71 = arith.constant 0 : index
    %111 = vector.load %arg10[%c1_69, %c0_70, %c0_71] : memref<4x32x3xf32, #tpu.memory_space<vmem>>, vector<1x32x3xf32>
    %112 = vector.shape_cast %111 : vector<1x32x3xf32> to vector<32x3xf32>
    %cst_72 = arith.constant dense<0.000000e+00> : vector<1x3xf32>
    %113 = tpu.matmul %110, %112, %cst_72 {dimension_numbers = #tpu.dot_dimension_numbers<[1], [0], [0], [1], [0, 0, 1, 1], [], []>} : vector<1x32xf32>, vector<32x3xf32>, vector<1x3xf32> -> vector<1x3xf32>
    %114 = arith.addf %109, %113 : vector<1x3xf32>
    %115 = vector.extract_strided_slice %103 {offsets = [2, 0], sizes = [1, 32], strides = [1, 1]} : vector<4x32xf32> to vector<1x32xf32>
    %c2_73 = arith.constant 2 : index
    %c0_74 = arith.constant 0 : index
    %c0_75 = arith.constant 0 : index
    %116 = vector.load %arg10[%c2_73, %c0_74, %c0_75] : memref<4x32x3xf32, #tpu.memory_space<vmem>>, vector<1x32x3xf32>
    %117 = vector.shape_cast %116 : vector<1x32x3xf32> to vector<32x3xf32>
    %cst_76 = arith.constant dense<0.000000e+00> : vector<1x3xf32>
    %118 = tpu.matmul %115, %117, %cst_76 {dimension_numbers = #tpu.dot_dimension_numbers<[1], [0], [0], [1], [0, 0, 1, 1], [], []>} : vector<1x32xf32>, vector<32x3xf32>, vector<1x3xf32> -> vector<1x3xf32>
    %119 = arith.addf %114, %118 : vector<1x3xf32>
    %120 = vector.extract_strided_slice %103 {offsets = [3, 0], sizes = [1, 32], strides = [1, 1]} : vector<4x32xf32> to vector<1x32xf32>
    %c3 = arith.constant 3 : index
    %c0_77 = arith.constant 0 : index
    %c0_78 = arith.constant 0 : index
    %121 = vector.load %arg10[%c3, %c0_77, %c0_78] : memref<4x32x3xf32, #tpu.memory_space<vmem>>, vector<1x32x3xf32>
    %122 = vector.shape_cast %121 : vector<1x32x3xf32> to vector<32x3xf32>
    %cst_79 = arith.constant dense<0.000000e+00> : vector<1x3xf32>
    %123 = tpu.matmul %120, %122, %cst_79 {dimension_numbers = #tpu.dot_dimension_numbers<[1], [0], [0], [1], [0, 0, 1, 1], [], []>} : vector<1x32xf32>, vector<32x3xf32>, vector<1x3xf32> -> vector<1x3xf32>
    %124 = arith.addf %119, %123 : vector<1x3xf32>
    %c0_80 = arith.constant 0 : index
    %c0_81 = arith.constant 0 : index
    %c0_82 = arith.constant 0 : index
    %125 = vector.load %arg12[%c0_80, %c0_81, %c0_82] : memref<1x1x3xf32, #tpu.memory_space<vmem>>, vector<1x1x3xf32>
    %126 = vector.shape_cast %125 : vector<1x1x3xf32> to vector<1x3xf32>
    %127 = vector.shape_cast %124 : vector<1x3xf32> to vector<1x1x3xf32>
    tpu.vector_store %arg12[%c0_80, %c0_81, %c0_82], %127 {strides = array<i32>} : memref<1x1x3xf32, #tpu.memory_space<vmem>>, vector<1x1x3xf32>,
    return
  }
  func.func @transform_0(%arg0: i32) -> (i32, i32, i32) {
    %c0_i32 = arith.constant 0 : i32
    %c0_i32_0 = arith.constant 0 : i32
    %c0_i32_1 = arith.constant 0 : i32
    return %arg0, %c0_i32, %c0_i32_0 : i32, i32, i32
  }
  func.func @transform_1(%arg0: i32) -> (i32, i32, i32) {
    %c0_i32 = arith.constant 0 : i32
    %c0_i32_0 = arith.constant 0 : i32
    %c0_i32_1 = arith.constant 0 : i32
    %c0_i32_2 = arith.constant 0 : i32
    return %c0_i32, %c0_i32_0, %c0_i32_1 : i32, i32, i32
  }
  func.func @transform_2(%arg0: i32) -> (i32, i32) {
    %c0_i32 = arith.constant 0 : i32
    %c0_i32_0 = arith.constant 0 : i32
    %c0_i32_1 = arith.constant 0 : i32
    return %c0_i32, %c0_i32_0 : i32, i32
  }
  func.func @transform_3(%arg0: i32) -> (i32, i32, i32) {
    %c0_i32 = arith.constant 0 : i32
    %c0_i32_0 = arith.constant 0 : i32
    %c0_i32_1 = arith.constant 0 : i32
    %c0_i32_2 = arith.constant 0 : i32
    return %c0_i32, %c0_i32_0, %c0_i32_1 : i32, i32, i32
  }
  func.func @transform_4(%arg0: i32) -> (i32, i32) {
    %c0_i32 = arith.constant 0 : i32
    %c0_i32_0 = arith.constant 0 : i32
    %c0_i32_1 = arith.constant 0 : i32
    return %c0_i32, %c0_i32_0 : i32, i32
  }
  func.func @transform_5(%arg0: i32) -> (i32, i32, i32) {
    %c0_i32 = arith.constant 0 : i32
    %c0_i32_0 = arith.constant 0 : i32
    %c0_i32_1 = arith.constant 0 : i32
    %c0_i32_2 = arith.constant 0 : i32
    return %c0_i32, %c0_i32_0, %c0_i32_1 : i32, i32, i32
  }
  func.func @transform_6(%arg0: i32) -> (i32, i32) {
    %c0_i32 = arith.constant 0 : i32
    %c0_i32_0 = arith.constant 0 : i32
    %c0_i32_1 = arith.constant 0 : i32
    return %c0_i32, %c0_i32_0 : i32, i32
  }
  func.func @transform_7(%arg0: i32) -> (i32, i32, i32) {
    %c0_i32 = arith.constant 0 : i32
    %c0_i32_0 = arith.constant 0 : i32
    %c0_i32_1 = arith.constant 0 : i32
    %c0_i32_2 = arith.constant 0 : i32
    return %c0_i32, %c0_i32_0, %c0_i32_1 : i32, i32, i32
  }
  func.func @transform_8(%arg0: i32) -> (i32, i32) {
    %c0_i32 = arith.constant 0 : i32
    %c0_i32_0 = arith.constant 0 : i32
    %c0_i32_1 = arith.constant 0 : i32
    return %c0_i32, %c0_i32_0 : i32, i32
  }
  func.func @transform_9(%arg0: i32) -> (i32, i32, i32) {
    %c0_i32 = arith.constant 0 : i32
    %c0_i32_0 = arith.constant 0 : i32
    %c0_i32_1 = arith.constant 0 : i32
    %c0_i32_2 = arith.constant 0 : i32
    return %c0_i32, %c0_i32_0, %c0_i32_1 : i32, i32, i32
  }
  func.func @transform_10(%arg0: i32) -> (i32, i32) {
    %c0_i32 = arith.constant 0 : i32
    %c0_i32_0 = arith.constant 0 : i32
    %c0_i32_1 = arith.constant 0 : i32
    return %c0_i32, %c0_i32_0 : i32, i32
  }
  func.func @transform_11(%arg0: i32) -> (i32, i32, i32) {
    %c0_i32 = arith.constant 0 : i32
    %c0_i32_0 = arith.constant 0 : i32
    %c0_i32_1 = arith.constant 0 : i32
    return %arg0, %c0_i32, %c0_i32_0 : i32, i32, i32
  }
}

</mosaic_0001>

<llo_original>
// kernel: tinyvgg_forward.1
$region0: #{tinyvgg_forward.1}
  #allocation0 [shape = 'u32[]', space=smem, size = 0x4, offset = 0x4, fixed_abs, tag = 'smem constant byte address 0x4 - core index']
  #allocation1 [shape = 'u32[144,128]{1,0:T(1,128)}', space=vmem, size = 0x12000, scoped, tag = 'internal scratch']
  %s0 = inlined_call_operand.vmem [shape: f32[2,16,64], index: 0, kind: input, shape index: {}]
  %s1 = inlined_call_operand.hbm [shape: f32[3,64,128], index: 1, kind: input, shape index: {}]
  %s2 = inlined_call_operand.vmem [shape: f32[1,128], index: 2, kind: input, shape index: {}]
  %s3 = inlined_call_operand.vmem [shape: f32[3,128,128], index: 3, kind: input, shape index: {}]
  %s4 = inlined_call_operand.vmem [shape: f32[1,128], index: 4, kind: input, shape index: {}]
  %s5 = inlined_call_operand.hbm [shape: f32[3,64,64], index: 5, kind: input, shape index: {}]
  %s6 = inlined_call_operand.vmem [shape: f32[1,64], index: 6, kind: input, shape index: {}]
  %s7 = inlined_call_operand.hbm [shape: f32[3,64,64], index: 7, kind: input, shape index: {}]
  %s8 = inlined_call_operand.vmem [shape: f32[1,64], index: 8, kind: input, shape index: {}]
  %s9 = inlined_call_operand.vmem [shape: f32[4,32,3], index: 9, kind: input, shape index: {}]
  %s10 = inlined_call_operand.vmem [shape: f32[1,3], index: 10, kind: input, shape index: {}]
  %s11 = inlined_call_operand.hbm [shape: f32[2,1,3], index: 11, kind: output, shape index: {}]
  %s12 = sld [smem:[#allocation0]]
  $region89: #{tinyvgg_forward.1} parent=0
    _
  %s14 = ssub.s32 1, %s12
  %s15 = scalar_select 0, %s14, %s12
  $region1: #{tinyvgg_forward.1} parent=0
    #allocation2 [shape = 'u8[98304]{0}', space=vmem, size = 0x18000, scoped, tag = 'input window, operand 1, single buffered']
    #allocation3 [shape = 's32[2]{0}', space=sflag, size = 0x8, scoped, tag = 'scoped memory for tinyvgg_forward.1']
    #allocation4 [shape = 's32[2]{0}', space=sflag, size = 0x8, scoped, tag = 'scoped memory for tinyvgg_forward.1']
    #allocation5 [shape = 'u8[98304]{0}', space=vmem, size = 0x18000, scoped, tag = 'input window, operand 5, single buffered']
    #allocation6 [shape = 's32[1]{0}', space=sflag, size = 0x4, scoped, tag = 'scoped memory for tinyvgg_forward.1']
    #allocation7 [shape = 'u8[98304]{0}', space=vmem, size = 0x18000, scoped, tag = 'input window, operand 7, single buffered']
    #allocation8 [shape = 'u8[1024]{0}', space=vmem, size = 0x400, scoped, tag = 'output window, operand 0']
    %16 = vsyncpa [#allocation3], 0
    %17 = vsyncpa [#allocation6], 0
    %18 = vsyncpa [#allocation4], 0
    %s19 = scalar_lea.sflag [#allocation4], 1
    %20 = vsyncpa %s19, 0
    loop: start=0, step=1, limit=4
    $region2: #{tinyvgg_forward.1} parent=1 // loop_pre_header
      _
    $region3: #{tinyvgg_forward.1} parent=1 // loop_header
      %s22 = sphi 0, %s26
      %p23 = scmp.ge.s32.totalorder %s22, 4
      %s32 = sphi 0, %s34
      %s35 = sphi 0, %s32
      %s36 = sphi 0, %s35
      %s52 = sphi 0, %s36
      %s56 = sphi 0, %s56
      %s58 = sphi 0, %s56
      %s59 = sphi 0, %s58
      %s73 = sphi 0, %s59
      %s77 = sphi 0, %s77
      %s79 = sphi 0, %s77
      %s80 = sphi 0, %s79
      %s94 = sphi 0, %s80
      %s98 = sphi 0, %s98
      %s100 = sphi 0, %s98
      %s101 = sphi 0, %s100
      %s115 = sphi 0, %s101
      %s119 = sphi 0, %s119
      %s121 = sphi 0, %s119
      %s122 = sphi 0, %s121
      %s136 = sphi 0, %s122
      %s140 = sphi 0, %s140
      %s142 = sphi 0, %s140
      %s143 = sphi 0, %s142
      %s157 = sphi 0, %s143
      %s161 = sphi 0, %s161
      %s163 = sphi 0, %s161
      %s164 = sphi 0, %s163
      %s178 = sphi 0, %s164
      %s182 = sphi 0, %s182
      %s184 = sphi 0, %s182
      %s185 = sphi 0, %s184
      %s199 = sphi 0, %s185
      %s203 = sphi 0, %s203
      %s205 = sphi 0, %s203
      %s206 = sphi 0, %s205
      %s220 = sphi 0, %s206
      %s224 = sphi 0, %s224
      %s226 = sphi 0, %s224
      %s227 = sphi 0, %s226
      %s241 = sphi 0, %s227
      %s245 = sphi 0, %s245
      %s247 = sphi 0, %s245
      %s248 = sphi 0, %s247
      %s262 = sphi 0, %s248
      %s268 = sphi 0, %s270
      %s271 = sphi 0, %s268
      %s272 = sphi 0, %s271
      %s288 = sphi 0, %s272
    $region4: #{tinyvgg_forward.1} parent=1 // loop_header_branch
      %25 = sbr.rel (%p23) target = $region8
    $region5: #{tinyvgg_forward.1} parent=1 // loop_body
      %s27 = ssub.s32 %s22, 1
      %s28 = ssub.s32 %s22, 2
      %s29 = sadd.s32 %s22, 1
      %s30 = ssub.s32 %s22, %s29
      %p31 = scmp.eq.s32.totalorder %s30, 0
      %s33 = sadd.s32 %s32, 1
      %s34 = scalar_select %p31, %s32, %s33
      %p37 = pneg %p31
      %p38 = scmp.eq.s32.totalorder %s22, 1
      %p39 = por %p37, %p38
      %p40 = scmp.ne.s32.totalorder %s32, %s35
      %p41 = scmp.eq.s32.totalorder %s22, 0
      %p42 = por %p40, %p41
      %p43 = scmp.ne.s32.totalorder %s32, %s35
      %p44 = scmp.eq.s32.totalorder %s27, 1
      %p45 = por %p43, %p44
      %p46 = scmp.ne.s32.totalorder %s35, %s36
      %p47 = scmp.eq.s32.totalorder %s27, 0
      %p48 = por %p46, %p47
      %p49 = scmp.ne.s32.totalorder %s35, %s36
      %p50 = scmp.eq.s32.totalorder %s28, 1
      %p51 = por %p49, %p50
      %p53 = scmp.ne.s32.totalorder %s36, %s52
      %p54 = scmp.eq.s32.totalorder %s28, 0
      %p55 = por %p53, %p54
      %s57 = sadd.s32 %s56, 1
      %p60 = scmp.eq.s32.totalorder %s22, 1
      %p61 = scmp.ne.s32.totalorder %s56, %s58
      %p62 = scmp.eq.s32.totalorder %s22, 0
      %p63 = por %p61, %p62
      %p64 = scmp.ne.s32.totalorder %s56, %s58
      %p65 = scmp.eq.s32.totalorder %s27, 1
      %p66 = por %p64, %p65
      %p67 = scmp.ne.s32.totalorder %s58, %s59
      %p68 = scmp.eq.s32.totalorder %s27, 0
      %p69 = por %p67, %p68
      %p70 = scmp.ne.s32.totalorder %s58, %s59
      %p71 = scmp.eq.s32.totalorder %s28, 1
      %p72 = por %p70, %p71
      %p74 = scmp.ne.s32.totalorder %s59, %s73
      %p75 = scmp.eq.s32.totalorder %s28, 0
      %p76 = por %p74, %p75
      %s78 = sadd.s32 %s77, 1
      %p81 = scmp.eq.s32.totalorder %s22, 1
      %p82 = scmp.ne.s32.totalorder %s77, %s79
      %p83 = scmp.eq.s32.totalorder %s22, 0
      %p84 = por %p82, %p83
      %p85 = scmp.ne.s32.totalorder %s77, %s79
      %p86 = scmp.eq.s32.totalorder %s27, 1
      %p87 = por %p85, %p86
      %p88 = scmp.ne.s32.totalorder %s79, %s80
      %p89 = scmp.eq.s32.totalorder %s27, 0
      %p90 = por %p88, %p89
      %p91 = scmp.ne.s32.totalorder %s79, %s80
      %p92 = scmp.eq.s32.totalorder %s28, 1
      %p93 = por %p91, %p92
      %p95 = scmp.ne.s32.totalorder %s80, %s94
      %p96 = scmp.eq.s32.totalorder %s28, 0
      %p97 = por %p95, %p96
      %s99 = sadd.s32 %s98, 1
      %p102 = scmp.eq.s32.totalorder %s22, 1
      %p103 = scmp.ne.s32.totalorder %s98, %s100
      %p104 = scmp.eq.s32.totalorder %s22, 0
      %p105 = por %p103, %p104
      %p106 = scmp.ne.s32.totalorder %s98, %s100
      %p107 = scmp.eq.s32.totalorder %s27, 1
      %p108 = por %p106, %p107
      %p109 = scmp.ne.s32.totalorder %s100, %s101
      %p110 = scmp.eq.s32.totalorder %s27, 0
      %p111 = por %p109, %p110
      %p112 = scmp.ne.s32.totalorder %s100, %s101
      %p113 = scmp.eq.s32.totalorder %s28, 1
      %p114 = por %p112, %p113
      %p116 = scmp.ne.s32.totalorder %s101, %s115
      %p117 = scmp.eq.s32.totalorder %s28, 0
      %p118 = por %p116, %p117
      %s120 = sadd.s32 %s119, 1
      %p123 = scmp.eq.s32.totalorder %s22, 1
      %p124 = scmp.ne.s32.totalorder %s119, %s121
      %p125 = scmp.eq.s32.totalorder %s22, 0
      %p126 = por %p124, %p125
      %p127 = scmp.ne.s32.totalorder %s119, %s121
      %p128 = scmp.eq.s32.totalorder %s27, 1
      %p129 = por %p127, %p128
      %p130 = scmp.ne.s32.totalorder %s121, %s122
      %p131 = scmp.eq.s32.totalorder %s27, 0
      %p132 = por %p130, %p131
      %p133 = scmp.ne.s32.totalorder %s121, %s122
      %p134 = scmp.eq.s32.totalorder %s28, 1
      %p135 = por %p133, %p134
      %p137 = scmp.ne.s32.totalorder %s122, %s136
      %p138 = scmp.eq.s32.totalorder %s28, 0
      %p139 = por %p137, %p138
      %s141 = sadd.s32 %s140, 1
      %p144 = scmp.eq.s32.totalorder %s22, 1
      %p145 = scmp.ne.s32.totalorder %s140, %s142
      %p146 = scmp.eq.s32.totalorder %s22, 0
      %p147 = por %p145, %p146
      %p148 = scmp.ne.s32.totalorder %s140, %s142
      %p149 = scmp.eq.s32.totalorder %s27, 1
      %p150 = por %p148, %p149
      %p151 = scmp.ne.s32.totalorder %s142, %s143
      %p152 = scmp.eq.s32.totalorder %s27, 0
      %p153 = por %p151, %p152
      %p154 = scmp.ne.s32.totalorder %s142, %s143
      %p155 = scmp.eq.s32.totalorder %s28, 1
      %p156 = por %p154, %p155
      %p158 = scmp.ne.s32.totalorder %s143, %s157
      %p159 = scmp.eq.s32.totalorder %s28, 0
      %p160 = por %p158, %p159
      %s162 = sadd.s32 %s161, 1
      %p165 = scmp.eq.s32.totalorder %s22, 1
      %p166 = scmp.ne.s32.totalorder %s161, %s163
      %p167 = scmp.eq.s32.totalorder %s22, 0
      %p168 = por %p166, %p167
      %p169 = scmp.ne.s32.totalorder %s161, %s163
      %p170 = scmp.eq.s32.totalorder %s27, 1
      %p171 = por %p169, %p170
      %p172 = scmp.ne.s32.totalorder %s163, %s164
      %p173 = scmp.eq.s32.totalorder %s27, 0
      %p174 = por %p172, %p173
      %p175 = scmp.ne.s32.totalorder %s163, %s164
      %p176 = scmp.eq.s32.totalorder %s28, 1
      %p177 = por %p175, %p176
      %p179 = scmp.ne.s32.totalorder %s164, %s178
      %p180 = scmp.eq.s32.totalorder %s28, 0
      %p181 = por %p179, %p180
      %s183 = sadd.s32 %s182, 1
      %p186 = scmp.eq.s32.totalorder %s22, 1
      %p187 = scmp.ne.s32.totalorder %s182, %s184
      %p188 = scmp.eq.s32.totalorder %s22, 0
      %p189 = por %p187, %p188
      %p190 = scmp.ne.s32.totalorder %s182, %s184
      %p191 = scmp.eq.s32.totalorder %s27, 1
      %p192 = por %p190, %p191
      %p193 = scmp.ne.s32.totalorder %s184, %s185
      %p194 = scmp.eq.s32.totalorder %s27, 0
      %p195 = por %p193, %p194
      %p196 = scmp.ne.s32.totalorder %s184, %s185
      %p197 = scmp.eq.s32.totalorder %s28, 1
      %p198 = por %p196, %p197
      %p200 = scmp.ne.s32.totalorder %s185, %s199
      %p201 = scmp.eq.s32.totalorder %s28, 0
      %p202 = por %p200, %p201
      %s204 = sadd.s32 %s203, 1
      %p207 = scmp.eq.s32.totalorder %s22, 1
      %p208 = scmp.ne.s32.totalorder %s203, %s205
      %p209 = scmp.eq.s32.totalorder %s22, 0
      %p210 = por %p208, %p209
      %p211 = scmp.ne.s32.totalorder %s203, %s205
      %p212 = scmp.eq.s32.totalorder %s27, 1
      %p213 = por %p211, %p212
      %p214 = scmp.ne.s32.totalorder %s205, %s206
      %p215 = scmp.eq.s32.totalorder %s27, 0
      %p216 = por %p214, %p215
      %p217 = scmp.ne.s32.totalorder %s205, %s206
      %p218 = scmp.eq.s32.totalorder %s28, 1
      %p219 = por %p217, %p218
      %p221 = scmp.ne.s32.totalorder %s206, %s220
      %p222 = scmp.eq.s32.totalorder %s28, 0
      %p223 = por %p221, %p222
      %s225 = sadd.s32 %s224, 1
      %p228 = scmp.eq.s32.totalorder %s22, 1
      %p229 = scmp.ne.s32.totalorder %s224, %s226
      %p230 = scmp.eq.s32.totalorder %s22, 0
      %p231 = por %p229, %p230
      %p232 = scmp.ne.s32.totalorder %s224, %s226
      %p233 = scmp.eq.s32.totalorder %s27, 1
      %p234 = por %p232, %p233
      %p235 = scmp.ne.s32.totalorder %s226, %s227
      %p236 = scmp.eq.s32.totalorder %s27, 0
      %p237 = por %p235, %p236
      %p238 = scmp.ne.s32.totalorder %s226, %s227
      %p239 = scmp.eq.s32.totalorder %s28, 1
      %p240 = por %p238, %p239
      %p242 = scmp.ne.s32.totalorder %s227, %s241
      %p243 = scmp.eq.s32.totalorder %s28, 0
      %p244 = por %p242, %p243
      %s246 = sadd.s32 %s245, 1
      %p249 = scmp.eq.s32.totalorder %s22, 1
      %p250 = scmp.ne.s32.totalorder %s245, %s247
      %p251 = scmp.eq.s32.totalorder %s22, 0
      %p252 = por %p250, %p251
      %p253 = scmp.ne.s32.totalorder %s245, %s247
      %p254 = scmp.eq.s32.totalorder %s27, 1
      %p255 = por %p253, %p254
      %p256 = scmp.ne.s32.totalorder %s247, %s248
      %p257 = scmp.eq.s32.totalorder %s27, 0
      %p258 = por %p256, %p257
      %p259 = scmp.ne.s32.totalorder %s247, %s248
      %p260 = scmp.eq.s32.totalorder %s28, 1
      %p261 = por %p259, %p260
      %p263 = scmp.ne.s32.totalorder %s248, %s262
      %p264 = scmp.eq.s32.totalorder %s28, 0
      %p265 = por %p263, %p264
      %s266 = ssub.s32 %s22, %s29
      %p267 = scmp.eq.s32.totalorder %s266, 0
      %s269 = sadd.s32 %s268, 1
      %s270 = scalar_select %p267, %s268, %s269
      %p273 = pneg %p267
      %p274 = scmp.eq.s32.totalorder %s22, 1
      %p275 = por %p273, %p274
      %p276 = scmp.ne.s32.totalorder %s268, %s271
      %p277 = scmp.eq.s32.totalorder %s22, 0
      %p278 = por %p276, %p277
      %p279 = scmp.ne.s32.totalorder %s268, %s271
      %p280 = scmp.eq.s32.totalorder %s27, 1
      %p281 = por %p279, %p280
      %p282 = scmp.ne.s32.totalorder %s271, %s272
      %p283 = scmp.eq.s32.totalorder %s27, 0
      %p284 = por %p282, %p283
      %p285 = scmp.ne.s32.totalorder %s271, %s272
      %p286 = scmp.eq.s32.totalorder %s28, 1
      %p287 = por %p285, %p286
      %p289 = scmp.ne.s32.totalorder %s272, %s288
      %p290 = scmp.eq.s32.totalorder %s28, 0
      %p291 = por %p289, %p290
      %p292 = scmp.le.s32.totalorder 1, %s22
      %p293 = scmp.lt.s32.totalorder %s22, 3
      %p294 = pnand %p292, %p293
      %p295 = pneg %p294
      // Predicated region
      $region9: #{tinyvgg_forward.1} parent=5 // pred_check
        _
      $region10: #{tinyvgg_forward.1} parent=5 // pred_check_branch
        %297 = sbr.rel (%p294) target = $region12
      $region11: #{tinyvgg_forward.1} parent=5 // pred_region
        %s298 = ssub.s32 %s22, 1
        // Predicated region
        $region13: #{tinyvgg_forward.1} parent=11 // pred_check
          %p299 = pneg %p69
        $region14: #{tinyvgg_forward.1} parent=11 // pred_check_branch
          %301 = sbr.rel (%p299) target = $region16
        $region15: #{tinyvgg_forward.1} parent=11 // pred_region
          %s303 = ssub.s32 3072, 3072
          %304 = vsyncadd [#allocation3], %s303
          %s305 = sshll.u32 [#allocation2], 4
          %s306 = int_to_ptr.vmem [resolvable:$true] %s305
          %311 = dma.hbm_to_vmem [thread:$0]  %s1, 3072, %s306, [#allocation3], 128, 128, 8
        $region16: #{tinyvgg_forward.1} parent=11 // pred_fallthru
          _
        // Predicated region
        $region17: #{tinyvgg_forward.1} parent=11 // pred_check
          %p312 = pneg %p90
        $region18: #{tinyvgg_forward.1} parent=11 // pred_check_branch
          %314 = sbr.rel (%p312) target = $region20
        $region19: #{tinyvgg_forward.1} parent=11 // pred_region
          _
        $region20: #{tinyvgg_forward.1} parent=11 // pred_fallthru
          _
        // Predicated region
        $region21: #{tinyvgg_forward.1} parent=11 // pred_check
          %p315 = pneg %p111
        $region22: #{tinyvgg_forward.1} parent=11 // pred_check_branch
          %317 = sbr.rel (%p315) target = $region24
        $region23: #{tinyvgg_forward.1} parent=11 // pred_region
          _
        $region24: #{tinyvgg_forward.1} parent=11 // pred_fallthru
          _
        // Predicated region
        $region25: #{tinyvgg_forward.1} parent=11 // pred_check
          %p318 = pneg %p132
        $region26: #{tinyvgg_forward.1} parent=11 // pred_check_branch
          %320 = sbr.rel (%p318) target = $region28
        $region27: #{tinyvgg_forward.1} parent=11 // pred_region
          _
        $region28: #{tinyvgg_forward.1} parent=11 // pred_fallthru
          _
        // Predicated region
        $region29: #{tinyvgg_forward.1} parent=11 // pred_check
          %p321 = pneg %p153
        $region30: #{tinyvgg_forward.1} parent=11 // pred_check_branch
          %323 = sbr.rel (%p321) target = $region32
        $region31: #{tinyvgg_forward.1} parent=11 // pred_region
          %s325 = ssub.s32 3072, 3072
          %326 = vsyncadd [#allocation6], %s325
          %s327 = sshll.u32 [#allocation5], 4
          %s328 = int_to_ptr.vmem [resolvable:$true] %s327
          %333 = dma.hbm_to_vmem [thread:$0]  %s5, 3072, %s328, [#allocation6], 128, 128, 8
        $region32: #{tinyvgg_forward.1} parent=11 // pred_fallthru
          _
        // Predicated region
        $region33: #{tinyvgg_forward.1} parent=11 // pred_check
          %p334 = pneg %p174
        $region34: #{tinyvgg_forward.1} parent=11 // pred_check_branch
          %336 = sbr.rel (%p334) target = $region36
        $region35: #{tinyvgg_forward.1} parent=11 // pred_region
          _
        $region36: #{tinyvgg_forward.1} parent=11 // pred_fallthru
          _
        // Predicated region
        $region37: #{tinyvgg_forward.1} parent=11 // pred_check
          %p337 = pneg %p195
        $region38: #{tinyvgg_forward.1} parent=11 // pred_check_branch
          %339 = sbr.rel (%p337) target = $region40
        $region39: #{tinyvgg_forward.1} parent=11 // pred_region
          %s341 = ssub.s32 3072, 3072
          %342 = vsyncadd [#allocation6], %s341
          %s343 = sshll.u32 [#allocation7], 4
          %s344 = int_to_ptr.vmem [resolvable:$true] %s343
          %349 = dma.hbm_to_vmem [thread:$0]  %s7, 3072, %s344, [#allocation6], 128, 128, 8
        $region40: #{tinyvgg_forward.1} parent=11 // pred_fallthru
          _
        // Predicated region
        $region41: #{tinyvgg_forward.1} parent=11 // pred_check
          %p350 = pneg %p216
        $region42: #{tinyvgg_forward.1} parent=11 // pred_check_branch
          %352 = sbr.rel (%p350) target = $region44
        $region43: #{tinyvgg_forward.1} parent=11 // pred_region
          _
        $region44: #{tinyvgg_forward.1} parent=11 // pred_fallthru
          _
        // Predicated region
        $region45: #{tinyvgg_forward.1} parent=11 // pred_check
          %p353 = pneg %p237
        $region46: #{tinyvgg_forward.1} parent=11 // pred_check_branch
          %355 = sbr.rel (%p353) target = $region48
        $region47: #{tinyvgg_forward.1} parent=11 // pred_region
          _
        $region48: #{tinyvgg_forward.1} parent=11 // pred_fallthru
          _
        // Predicated region
        $region49: #{tinyvgg_forward.1} parent=11 // pred_check
          %p356 = pneg %p258
        $region50: #{tinyvgg_forward.1} parent=11 // pred_check_branch
          %358 = sbr.rel (%p356) target = $region52
        $region51: #{tinyvgg_forward.1} parent=11 // pred_region
          _
        $region52: #{tinyvgg_forward.1} parent=11 // pred_fallthru
          _
      $region12: #{tinyvgg_forward.1} parent=5 // pred_fallthru
        _
      %p359 = scmp.lt.s32.totalorder %s22, 2
      // Predicated region
      $region53: #{tinyvgg_forward.1} parent=5 // pred_check
        %p360 = pneg %p359
      $region54: #{tinyvgg_forward.1} parent=5 // pred_check_branch
        %362 = sbr.rel (%p360) target = $region56
      $region55: #{tinyvgg_forward.1} parent=5 // pred_region
        // Predicated region
        $region57: #{tinyvgg_forward.1} parent=55 // pred_check
          %p363 = pneg %p42
        $region58: #{tinyvgg_forward.1} parent=55 // pred_check_branch
          %365 = sbr.rel (%p363) target = $region60
        $region59: #{tinyvgg_forward.1} parent=55 // pred_region
          %p366 = scmp.lt.s32.totalorder %s22, 1
          %s367 = scalar_select %p366, %s22, 1
          %s368 = smul.addr %s367, 2
          %s369 = smul.addr %s368, 8
          %s370 = scalar_lea.vmem %s0, %s369
        $region60: #{tinyvgg_forward.1} parent=55 // pred_fallthru
          _
      $region56: #{tinyvgg_forward.1} parent=5 // pred_fallthru
        _
      %p371 = scmp.le.s32.totalorder 1, %s22
      %p372 = scmp.lt.s32.totalorder %s22, 3
      %p373 = pnand %p371, %p372
      %p374 = pneg %p373
      // Predicated region
      $region61: #{tinyvgg_forward.1} parent=5 // pred_check
        _
      $region62: #{tinyvgg_forward.1} parent=5 // pred_check_branch
        %376 = sbr.rel (%p373) target = $region64
      $region63: #{tinyvgg_forward.1} parent=5 // pred_region
        %s377 = ssub.s32 %s22, 1
        // Predicated region
        $region65: #{tinyvgg_forward.1} parent=63 // pred_check
          %p378 = pneg %p69
        $region66: #{tinyvgg_forward.1} parent=63 // pred_check_branch
          %380 = sbr.rel (%p378) target = $region68
        $region67: #{tinyvgg_forward.1} parent=63 // pred_region
          %381 = dma.done [#allocation3], 3072
        $region68: #{tinyvgg_forward.1} parent=63 // pred_fallthru
          _
        // Predicated region
        $region69: #{tinyvgg_forward.1} parent=63 // pred_check
          %p382 = pneg %p153
        $region70: #{tinyvgg_forward.1} parent=63 // pred_check_branch
          %384 = sbr.rel (%p382) target = $region72
        $region71: #{tinyvgg_forward.1} parent=63 // pred_region
          %385 = dma.done [#allocation6], 3072
        $region72: #{tinyvgg_forward.1} parent=63 // pred_fallthru
          _
        // Predicated region
        $region73: #{tinyvgg_forward.1} parent=63 // pred_check
          %p386 = pneg %p195
        $region74: #{tinyvgg_forward.1} parent=63 // pred_check_branch
          %388 = sbr.rel (%p386) target = $region76
        $region75: #{tinyvgg_forward.1} parent=63 // pred_region
          %389 = dma.done [#allocation6], 3072
        $region76: #{tinyvgg_forward.1} parent=63 // pred_fallthru
          _
        %p390 = scmp.lt.s32.totalorder %s27, 1
        %s391 = scalar_select %p390, %s27, 1
        %s392 = smul.addr %s391, 2
        %s393 = smul.addr %s392, 8
        %s394 = scalar_lea.vmem %s0, %s393
        %p395 = pneg %p48
        %p396 = pneg %p45
        %p397 = pneg %p69
        %p398 = pneg %p66
        %p399 = pneg %p90
        %p400 = pneg %p87
        %p401 = pneg %p111
        %p402 = pneg %p108
        %p403 = pneg %p132
        %p404 = pneg %p129
        %p405 = pneg %p153
        %p406 = pneg %p150
        %p407 = pneg %p174
        %p408 = pneg %p171
        %p409 = pneg %p195
        %p410 = pneg %p192
        %p411 = pneg %p216
        %p412 = pneg %p213
        %p413 = pneg %p237
        %p414 = pneg %p234
        %p415 = pneg %p258
        %p416 = pneg %p255
        %p417 = pneg %p284
        %p418 = pneg %p281
        %s419 = sand.u32 %s271, 1
        %s420 = scalar_lea.sflag [#allocation4], %s419
        %s421 = sand.u32 %s271, 1
        %s422 = scalar_lea.vmem [#allocation8], %s421
        %p423 = scmp.lt.s32.totalorder %s27, 1
        %s424 = scalar_select %p423, %s27, 1
        %s425 = smul.addr %s424, 2
        %s426 = smul.addr %s425, 8
        %s427 = scalar_lea.vmem %s0, %s426
        %v428 = vld [vmem:[%s427] sm:$0xff]
        %v429 = vld [vmem:[%s427 + $0x8] sm:$0xff]
        %vm432 = vcmask 1040384
        %v433 = vrot.slane %v428, 7
        %v434 = vrot.slane %v429, 7
        %v435 = vsel %vm432, %v433, %v434
        %v437 = vsel %vm432, 0.0, %v433
        %vm438 = vcmask 1046528
        %v439 = vrot.slane %v428, 1
        %v440 = vrot.slane %v429, 1
        %v441 = vsel %vm438, %v439, %v440
        %v443 = vsel %vm438, %v440, 0.0
        %v444 = vld [vmem:[#allocation2] sm:$0xff]
        %v445 = vld [vmem:[#allocation2 + $0x8] sm:$0xff]
        %v446 = vld [vmem:[#allocation2 + $0x10] sm:$0xff]
        %v447 = vld [vmem:[#allocation2 + $0x18] sm:$0xff]
        %v448 = vld [vmem:[#allocation2 + $0x20] sm:$0xff]
        %v449 = vld [vmem:[#allocation2 + $0x28] sm:$0xff]
        %v450 = vld [vmem:[#allocation2 + $0x30] sm:$0xff]
        %v451 = vld [vmem:[#allocation2 + $0x38] sm:$0xff]
        %s452 = scalar_lea.vmem [#allocation2], 64
        %v453 = vld [vmem:[%s452] sm:$0xff]
        %v454 = vld [vmem:[%s452 + $0x8] sm:$0xff]
        %v455 = vld [vmem:[%s452 + $0x10] sm:$0xff]
        %v456 = vld [vmem:[%s452 + $0x18] sm:$0xff]
        %v457 = vld [vmem:[%s452 + $0x20] sm:$0xff]
        %v458 = vld [vmem:[%s452 + $0x28] sm:$0xff]
        %v459 = vld [vmem:[%s452 + $0x30] sm:$0xff]
        %v460 = vld [vmem:[%s452 + $0x38] sm:$0xff]
        %vm461 = vcmask 523264
        %v462 = vsel %vm461, %v428, 0
        %v464 = vsel %vm461, %v429, 0
        %466 = vmatprep.subr.mxu0 0.0
        %467 = vmatpush1.msra.mxu0 0.0
        %468 = vmatprep.subr.mxu0 0.0
        %469 = vmatpush1.msra.mxu0 0.0
        %470 = vmatprep.subr.mxu0 0.0
        %471 = vmatpush1.msra.mxu0 0.0
        %472 = vmatprep.subr.mxu0 0.0
        %473 = vmatpush1.msra.mxu0 0.0
        %474 = vmatprep.subr.mxu0 0.0
        %475 = vmatpush1.msra.mxu0 0.0
        %476 = vmatprep.subr.mxu0 0.0
        %477 = vmatpush1.msra.mxu0 0.0
        %478 = vmatprep.subr.mxu0 0.0
        %479 = vmatpush1.msra.mxu0 0.0
        %480 = vmatprep.subr.mxu0 0.0
        %481 = vmatpush1.msra.mxu0 0.0
        %482 = vmatprep.subr.mxu0 0.0
        %483 = vmatpush1.msra.mxu0 %v460
        %484 = vmatprep.subr.mxu0 0.0
        %485 = vmatpush1.msra.mxu0 %v459
        %486 = vmatprep.subr.mxu0 0.0
        %487 = vmatpush1.msra.mxu0 %v458
        %488 = vmatprep.subr.mxu0 0.0
        %489 = vmatpush1.msra.mxu0 %v457
        %490 = vmatprep.subr.mxu0 0.0
        %491 = vmatpush1.msra.mxu0 %v456
        %492 = vmatprep.subr.mxu0 0.0
        %493 = vmatpush1.msra.mxu0 %v455
        %494 = vmatprep.subr.mxu0 0.0
        %495 = vmatpush1.msra.mxu0 %v454
        %496 = vmatprep.subr.mxu0 0.0
        %497 = vmatpush1.msra.mxu0 %v453
        %498 = vmatprep.subr.mxu0 0.0
        %499 = vmatpush2.msra.mxu0 0.0
        %500 = vmatprep.subr.mxu0 0.0
        %501 = vmatpush2.msra.mxu0 0.0
        %502 = vmatprep.subr.mxu0 0.0
        %503 = vmatpush2.msra.mxu0 0.0
        %504 = vmatprep.subr.mxu0 0.0
        %505 = vmatpush2.msra.mxu0 0.0
        %506 = vmatprep.subr.mxu0 0.0
        %507 = vmatpush2.msra.mxu0 0.0
        %508 = vmatprep.subr.mxu0 0.0
        %509 = vmatpush2.msra.mxu0 0.0
        %510 = vmatprep.subr.mxu0 0.0
        %511 = vmatpush2.msra.mxu0 0.0
        %512 = vmatprep.subr.mxu0 0.0
        %513 = vmatpush2.msra.mxu0 0.0
        %514 = vmatprep.subr.mxu0 0.0
        %515 = vmatpush2.msra.mxu0 0.0
        %516 = vmatprep.subr.mxu0 0.0
        %517 = vmatpush2.msra.mxu0 0.0
        %518 = vmatprep.subr.mxu0 0.0
        %519 = vmatpush2.msra.mxu0 0.0
        %520 = vmatprep.subr.mxu0 0.0
        %521 = vmatpush2.msra.mxu0 0.0
        %522 = vmatprep.subr.mxu0 0.0
        %523 = vmatpush2.msra.mxu0 0.0
        %524 = vmatprep.subr.mxu0 0.0
        %525 = vmatpush2.msra.mxu0 0.0
        %526 = vmatprep.subr.mxu0 0.0
        %527 = vmatpush2.msra.mxu0 0.0
        %528 = vmatprep.subr.mxu0 0.0
        %529 = vmatpush2.msra.mxu0 0.0
        %530 = vmatprep.mubr.f32.mxu0 0.0
        %531 = vmatmul.mubr.f32.gmra.mxu0 %v462
        %v532 = vpop.f32.mrf.mxu0
        %v533 = vadd.f32 0.0, %v532
        %v534 = vpop.f32.mrf.mxu0
        %535 = vmatprep.mubr.f32.mxu0 0.0
        %536 = vmatmul.mubr.f32.gmra.mxu0 %v464
        %v537 = vpop.f32.mrf.mxu0
        %v538 = vadd.f32 0.0, %v537
        %v539 = vpop.f32.mrf.mxu0
        %540 = vdwg.mxu0
        %v542 = vsel %vm461, %v437, 0
        %v544 = vsel %vm461, %v435, 0
        %546 = vmatprep.subr.mxu0 0.0
        %547 = vmatpush1.msra.mxu0 0.0
        %548 = vmatprep.subr.mxu0 0.0
        %549 = vmatpush1.msra.mxu0 0.0
        %550 = vmatprep.subr.mxu0 0.0
        %551 = vmatpush1.msra.mxu0 0.0
        %552 = vmatprep.subr.mxu0 0.0
        %553 = vmatpush1.msra.mxu0 0.0
        %554 = vmatprep.subr.mxu0 0.0
        %555 = vmatpush1.msra.mxu0 0.0
        %556 = vmatprep.subr.mxu0 0.0
        %557 = vmatpush1.msra.mxu0 0.0
        %558 = vmatprep.subr.mxu0 0.0
        %559 = vmatpush1.msra.mxu0 0.0
        %560 = vmatprep.subr.mxu0 0.0
        %561 = vmatpush1.msra.mxu0 0.0
        %562 = vmatprep.subr.mxu0 0.0
        %563 = vmatpush1.msra.mxu0 %v451
        %564 = vmatprep.subr.mxu0 0.0
        %565 = vmatpush1.msra.mxu0 %v450
        %566 = vmatprep.subr.mxu0 0.0
        %567 = vmatpush1.msra.mxu0 %v449
        %568 = vmatprep.subr.mxu0 0.0
        %569 = vmatpush1.msra.mxu0 %v448
        %570 = vmatprep.subr.mxu0 0.0
        %571 = vmatpush1.msra.mxu0 %v447
        %572 = vmatprep.subr.mxu0 0.0
        %573 = vmatpush1.msra.mxu0 %v446
        %574 = vmatprep.subr.mxu0 0.0
        %575 = vmatpush1.msra.mxu0 %v445
        %576 = vmatprep.subr.mxu0 0.0
        %577 = vmatpush1.msra.mxu0 %v444
        %578 = vmatprep.subr.mxu0 0.0
        %579 = vmatpush2.msra.mxu0 0.0
        %580 = vmatprep.subr.mxu0 0.0
        %581 = vmatpush2.msra.mxu0 0.0
        %582 = vmatprep.subr.mxu0 0.0
        %583 = vmatpush2.msra.mxu0 0.0
        %584 = vmatprep.subr.mxu0 0.0
        %585 = vmatpush2.msra.mxu0 0.0
        %586 = vmatprep.subr.mxu0 0.0
        %587 = vmatpush2.msra.mxu0 0.0
        %588 = vmatprep.subr.mxu0 0.0
        %589 = vmatpush2.msra.mxu0 0.0
        %590 = vmatprep.subr.mxu0 0.0
        %591 = vmatpush2.msra.mxu0 0.0
        %592 = vmatprep.subr.mxu0 0.0
        %593 = vmatpush2.msra.mxu0 0.0
        %594 = vmatprep.subr.mxu0 0.0
        %595 = vmatpush2.msra.mxu0 0.0
        %596 = vmatprep.subr.mxu0 0.0
        %597 = vmatpush2.msra.mxu0 0.0
        %598 = vmatprep.subr.mxu0 0.0
        %599 = vmatpush2.msra.mxu0 0.0
        %600 = vmatprep.subr.mxu0 0.0
        %601 = vmatpush2.msra.mxu0 0.0
        %602 = vmatprep.subr.mxu0 0.0
        %603 = vmatpush2.msra.mxu0 0.0
        %604 = vmatprep.subr.mxu0 0.0
        %605 = vmatpush2.msra.mxu0 0.0
        %606 = vmatprep.subr.mxu0 0.0
        %607 = vmatpush2.msra.mxu0 0.0
        %608 = vmatprep.subr.mxu0 0.0
        %609 = vmatpush2.msra.mxu0 0.0
        %610 = vmatprep.mubr.f32.mxu0 0.0
        %611 = vmatmul.mubr.f32.gmra.mxu0 %v542
        %v612 = vpop.f32.mrf.mxu0
        %v613 = vadd.f32 %v533, %v612
        %v614 = vpop.f32.mrf.mxu0
        %615 = vmatprep.mubr.f32.mxu0 0.0
        %616 = vmatmul.mubr.f32.gmra.mxu0 %v544
        %v617 = vpop.f32.mrf.mxu0
        %v618 = vadd.f32 %v538, %v617
        %v619 = vpop.f32.mrf.mxu0
        %620 = vdwg.mxu0
        %s621 = scalar_lea.vmem [#allocation2], 128
        %v622 = vld [vmem:[%s621] sm:$0xff]
        %v623 = vld [vmem:[%s621 + $0x8] sm:$0xff]
        %v624 = vld [vmem:[%s621 + $0x10] sm:$0xff]
        %v625 = vld [vmem:[%s621 + $0x18] sm:$0xff]
        %v626 = vld [vmem:[%s621 + $0x20] sm:$0xff]
        %v627 = vld [vmem:[%s621 + $0x28] sm:$0xff]
        %v628 = vld [vmem:[%s621 + $0x30] sm:$0xff]
        %v629 = vld [vmem:[%s621 + $0x38] sm:$0xff]
        %v630 = vsel %vm461, %v441, 0
        %v633 = vsel %vm461, %v443, 0
        %635 = vmatprep.subr.mxu0 0.0
        %636 = vmatpush1.msra.mxu0 0.0
        %637 = vmatprep.subr.mxu0 0.0
        %638 = vmatpush1.msra.mxu0 0.0
        %639 = vmatprep.subr.mxu0 0.0
        %640 = vmatpush1.msra.mxu0 0.0
        %641 = vmatprep.subr.mxu0 0.0
        %642 = vmatpush1.msra.mxu0 0.0
        %643 = vmatprep.subr.mxu0 0.0
        %644 = vmatpush1.msra.mxu0 0.0
        %645 = vmatprep.subr.mxu0 0.0
        %646 = vmatpush1.msra.mxu0 0.0
        %647 = vmatprep.subr.mxu0 0.0
        %648 = vmatpush1.msra.mxu0 0.0
        %649 = vmatprep.subr.mxu0 0.0
        %650 = vmatpush1.msra.mxu0 0.0
        %651 = vmatprep.subr.mxu0 0.0
        %652 = vmatpush1.msra.mxu0 %v629
        %653 = vmatprep.subr.mxu0 0.0
        %654 = vmatpush1.msra.mxu0 %v628
        %655 = vmatprep.subr.mxu0 0.0
        %656 = vmatpush1.msra.mxu0 %v627
        %657 = vmatprep.subr.mxu0 0.0
        %658 = vmatpush1.msra.mxu0 %v626
        %659 = vmatprep.subr.mxu0 0.0
        %660 = vmatpush1.msra.mxu0 %v625
        %661 = vmatprep.subr.mxu0 0.0
        %662 = vmatpush1.msra.mxu0 %v624
        %663 = vmatprep.subr.mxu0 0.0
        %664 = vmatpush1.msra.mxu0 %v623
        %665 = vmatprep.subr.mxu0 0.0
        %666 = vmatpush1.msra.mxu0 %v622
        %667 = vmatprep.subr.mxu0 0.0
        %668 = vmatpush2.msra.mxu0 0.0
        %669 = vmatprep.subr.mxu0 0.0
        %670 = vmatpush2.msra.mxu0 0.0
        %671 = vmatprep.subr.mxu0 0.0
        %672 = vmatpush2.msra.mxu0 0.0
        %673 = vmatprep.subr.mxu0 0.0
        %674 = vmatpush2.msra.mxu0 0.0
        %675 = vmatprep.subr.mxu0 0.0
        %676 = vmatpush2.msra.mxu0 0.0
        %677 = vmatprep.subr.mxu0 0.0
        %678 = vmatpush2.msra.mxu0 0.0
        %679 = vmatprep.subr.mxu0 0.0
        %680 = vmatpush2.msra.mxu0 0.0
        %681 = vmatprep.subr.mxu0 0.0
        %682 = vmatpush2.msra.mxu0 0.0
        %683 = vmatprep.subr.mxu0 0.0
        %684 = vmatpush2.msra.mxu0 0.0
        %685 = vmatprep.subr.mxu0 0.0
        %686 = vmatpush2.msra.mxu0 0.0
        %687 = vmatprep.subr.mxu0 0.0
        %688 = vmatpush2.msra.mxu0 0.0
        %689 = vmatprep.subr.mxu0 0.0
        %690 = vmatpush2.msra.mxu0 0.0
        %691 = vmatprep.subr.mxu0 0.0
        %692 = vmatpush2.msra.mxu0 0.0
        %693 = vmatprep.subr.mxu0 0.0
        %694 = vmatpush2.msra.mxu0 0.0
        %695 = vmatprep.subr.mxu0 0.0
        %696 = vmatpush2.msra.mxu0 0.0
        %697 = vmatprep.subr.mxu0 0.0
        %698 = vmatpush2.msra.mxu0 0.0
        %699 = vmatprep.mubr.f32.mxu0 0.0
        %700 = vmatmul.mubr.f32.gmra.mxu0 %v630
        %v701 = vpop.f32.mrf.mxu0
        %v702 = vadd.f32 0.0, %v701
        %v703 = vpop.f32.mrf.mxu0
        %704 = vmatprep.mubr.f32.mxu0 0.0
        %705 = vmatmul.mubr.f32.gmra.mxu0 %v633
        %v706 = vpop.f32.mrf.mxu0
        %v707 = vadd.f32 0.0, %v706
        %v708 = vpop.f32.mrf.mxu0
        %709 = vdwg.mxu0
        %v710 = vadd.f32 %v613, %v702
        %v711 = vadd.f32 %v618, %v707
        %v712 = vld [vmem:[%s2] sm:$0x1]
        %v714 = vlaneseq
        %v715 = vshrl.u32 %v714, 7
        %v716 = vsub.s32 0, %v715
        %v717 = vrot.slane %v712, %v716
        %v719 = vadd.f32 %v710, %v717
        %v720 = vadd.f32 %v711, %v717
        %v721 = vmax.f32 %v719, 0.0
        %v722 = vmax.f32 %v720, 0.0
        %v725 = vrot.slane %v721, 7
        %v726 = vrot.slane %v722, 7
        %v727 = vsel %vm432, %v725, %v726
        %v730 = vsel %vm432, 0.0, %v725
        %v731 = vrot.slane %v721, 1
        %v732 = vrot.slane %v722, 1
        %v733 = vsel %vm438, %v731, %v732
        %v736 = vsel %vm438, %v732, 0.0
        %v737 = vld [vmem:[%s3] sm:$0xff]
        %v738 = vld [vmem:[%s3 + $0x8] sm:$0xff]
        %v739 = vld [vmem:[%s3 + $0x10] sm:$0xff]
        %v740 = vld [vmem:[%s3 + $0x18] sm:$0xff]
        %v741 = vld [vmem:[%s3 + $0x20] sm:$0xff]
        %v742 = vld [vmem:[%s3 + $0x28] sm:$0xff]
        %v743 = vld [vmem:[%s3 + $0x30] sm:$0xff]
        %v744 = vld [vmem:[%s3 + $0x38] sm:$0xff]
        %v745 = vld [vmem:[%s3 + $0x40] sm:$0xff]
        %v746 = vld [vmem:[%s3 + $0x48] sm:$0xff]
        %v747 = vld [vmem:[%s3 + $0x50] sm:$0xff]
        %v748 = vld [vmem:[%s3 + $0x58] sm:$0xff]
        %v749 = vld [vmem:[%s3 + $0x60] sm:$0xff]
        %v750 = vld [vmem:[%s3 + $0x68] sm:$0xff]
        %v751 = vld [vmem:[%s3 + $0x70] sm:$0xff]
        %v752 = vld [vmem:[%s3 + $0x78] sm:$0xff]
        %s753 = scalar_lea.vmem %s3, 128
        %v754 = vld [vmem:[%s753] sm:$0xff]
        %v755 = vld [vmem:[%s753 + $0x8] sm:$0xff]
        %v756 = vld [vmem:[%s753 + $0x10] sm:$0xff]
        %v757 = vld [vmem:[%s753 + $0x18] sm:$0xff]
        %v758 = vld [vmem:[%s753 + $0x20] sm:$0xff]
        %v759 = vld [vmem:[%s753 + $0x28] sm:$0xff]
        %v760 = vld [vmem:[%s753 + $0x30] sm:$0xff]
        %v761 = vld [vmem:[%s753 + $0x38] sm:$0xff]
        %v762 = vld [vmem:[%s753 + $0x40] sm:$0xff]
        %v763 = vld [vmem:[%s753 + $0x48] sm:$0xff]
        %v764 = vld [vmem:[%s753 + $0x50] sm:$0xff]
        %v765 = vld [vmem:[%s753 + $0x58] sm:$0xff]
        %v766 = vld [vmem:[%s753 + $0x60] sm:$0xff]
        %v767 = vld [vmem:[%s753 + $0x68] sm:$0xff]
        %v768 = vld [vmem:[%s753 + $0x70] sm:$0xff]
        %v769 = vld [vmem:[%s753 + $0x78] sm:$0xff]
        %770 = vmatprep.subr.mxu0 0.0
        %771 = vmatpush1.msra.mxu0 %v769
        %772 = vmatprep.subr.mxu0 0.0
        %773 = vmatpush1.msra.mxu0 %v768
        %774 = vmatprep.subr.mxu0 0.0
        %775 = vmatpush1.msra.mxu0 %v767
        %776 = vmatprep.subr.mxu0 0.0
        %777 = vmatpush1.msra.mxu0 %v766
        %778 = vmatprep.subr.mxu0 0.0
        %779 = vmatpush1.msra.mxu0 %v765
        %780 = vmatprep.subr.mxu0 0.0
        %781 = vmatpush1.msra.mxu0 %v764
        %782 = vmatprep.subr.mxu0 0.0
        %783 = vmatpush1.msra.mxu0 %v763
        %784 = vmatprep.subr.mxu0 0.0
        %785 = vmatpush1.msra.mxu0 %v762
        %786 = vmatprep.subr.mxu0 0.0
        %787 = vmatpush1.msra.mxu0 %v761
        %788 = vmatprep.subr.mxu0 0.0
        %789 = vmatpush1.msra.mxu0 %v760
        %790 = vmatprep.subr.mxu0 0.0
        %791 = vmatpush1.msra.mxu0 %v759
        %792 = vmatprep.subr.mxu0 0.0
        %793 = vmatpush1.msra.mxu0 %v758
        %794 = vmatprep.subr.mxu0 0.0
        %795 = vmatpush1.msra.mxu0 %v757
        %796 = vmatprep.subr.mxu0 0.0
        %797 = vmatpush1.msra.mxu0 %v756
        %798 = vmatprep.subr.mxu0 0.0
        %799 = vmatpush1.msra.mxu0 %v755
        %800 = vmatprep.subr.mxu0 0.0
        %801 = vmatpush1.msra.mxu0 %v754
        %802 = vmatprep.subr.mxu0 0.0
        %803 = vmatpush2.msra.mxu0 0.0
        %804 = vmatprep.subr.mxu0 0.0
        %805 = vmatpush2.msra.mxu0 0.0
        %806 = vmatprep.subr.mxu0 0.0
        %807 = vmatpush2.msra.mxu0 0.0
        %808 = vmatprep.subr.mxu0 0.0
        %809 = vmatpush2.msra.mxu0 0.0
        %810 = vmatprep.subr.mxu0 0.0
        %811 = vmatpush2.msra.mxu0 0.0
        %812 = vmatprep.subr.mxu0 0.0
        %813 = vmatpush2.msra.mxu0 0.0
        %814 = vmatprep.subr.mxu0 0.0
        %815 = vmatpush2.msra.mxu0 0.0
        %816 = vmatprep.subr.mxu0 0.0
        %817 = vmatpush2.msra.mxu0 0.0
        %818 = vmatprep.subr.mxu0 0.0
        %819 = vmatpush2.msra.mxu0 0.0
        %820 = vmatprep.subr.mxu0 0.0
        %821 = vmatpush2.msra.mxu0 0.0
        %822 = vmatprep.subr.mxu0 0.0
        %823 = vmatpush2.msra.mxu0 0.0
        %824 = vmatprep.subr.mxu0 0.0
        %825 = vmatpush2.msra.mxu0 0.0
        %826 = vmatprep.subr.mxu0 0.0
        %827 = vmatpush2.msra.mxu0 0.0
        %828 = vmatprep.subr.mxu0 0.0
        %829 = vmatpush2.msra.mxu0 0.0
        %830 = vmatprep.subr.mxu0 0.0
        %831 = vmatpush2.msra.mxu0 0.0
        %832 = vmatprep.subr.mxu0 0.0
        %833 = vmatpush2.msra.mxu0 0.0
        %834 = vmatprep.mubr.f32.mxu0 0.0
        %835 = vmatmul.mubr.f32.gmra.mxu0 %v721
        %v836 = vpop.f32.mrf.mxu0
        %v837 = vadd.f32 0.0, %v836
        %v838 = vpop.f32.mrf.mxu0
        %839 = vmatprep.mubr.f32.mxu0 0.0
        %840 = vmatmul.mubr.f32.gmra.mxu0 %v722
        %v841 = vpop.f32.mrf.mxu0
        %v842 = vadd.f32 0.0, %v841
        %v843 = vpop.f32.mrf.mxu0
        %844 = vdwg.mxu0
        %845 = vmatprep.subr.mxu0 0.0
        %846 = vmatpush1.msra.mxu0 %v752
        %847 = vmatprep.subr.mxu0 0.0
        %848 = vmatpush1.msra.mxu0 %v751
        %849 = vmatprep.subr.mxu0 0.0
        %850 = vmatpush1.msra.mxu0 %v750
        %851 = vmatprep.subr.mxu0 0.0
        %852 = vmatpush1.msra.mxu0 %v749
        %853 = vmatprep.subr.mxu0 0.0
        %854 = vmatpush1.msra.mxu0 %v748
        %855 = vmatprep.subr.mxu0 0.0
        %856 = vmatpush1.msra.mxu0 %v747
        %857 = vmatprep.subr.mxu0 0.0
        %858 = vmatpush1.msra.mxu0 %v746
        %859 = vmatprep.subr.mxu0 0.0
        %860 = vmatpush1.msra.mxu0 %v745
        %861 = vmatprep.subr.mxu0 0.0
        %862 = vmatpush1.msra.mxu0 %v744
        %863 = vmatprep.subr.mxu0 0.0
        %864 = vmatpush1.msra.mxu0 %v743
        %865 = vmatprep.subr.mxu0 0.0
        %866 = vmatpush1.msra.mxu0 %v742
        %867 = vmatprep.subr.mxu0 0.0
        %868 = vmatpush1.msra.mxu0 %v741
        %869 = vmatprep.subr.mxu0 0.0
        %870 = vmatpush1.msra.mxu0 %v740
        %871 = vmatprep.subr.mxu0 0.0
        %872 = vmatpush1.msra.mxu0 %v739
        %873 = vmatprep.subr.mxu0 0.0
        %874 = vmatpush1.msra.mxu0 %v738
        %875 = vmatprep.subr.mxu0 0.0
        %876 = vmatpush1.msra.mxu0 %v737
        %877 = vmatprep.subr.mxu0 0.0
        %878 = vmatpush2.msra.mxu0 0.0
        %879 = vmatprep.subr.mxu0 0.0
        %880 = vmatpush2.msra.mxu0 0.0
        %881 = vmatprep.subr.mxu0 0.0
        %882 = vmatpush2.msra.mxu0 0.0
        %883 = vmatprep.subr.mxu0 0.0
        %884 = vmatpush2.msra.mxu0 0.0
        %885 = vmatprep.subr.mxu0 0.0
        %886 = vmatpush2.msra.mxu0 0.0
        %887 = vmatprep.subr.mxu0 0.0
        %888 = vmatpush2.msra.mxu0 0.0
        %889 = vmatprep.subr.mxu0 0.0
        %890 = vmatpush2.msra.mxu0 0.0
        %891 = vmatprep.subr.mxu0 0.0
        %892 = vmatpush2.msra.mxu0 0.0
        %893 = vmatprep.subr.mxu0 0.0
        %894 = vmatpush2.msra.mxu0 0.0
        %895 = vmatprep.subr.mxu0 0.0
        %896 = vmatpush2.msra.mxu0 0.0
        %897 = vmatprep.subr.mxu0 0.0
        %898 = vmatpush2.msra.mxu0 0.0
        %899 = vmatprep.subr.mxu0 0.0
        %900 = vmatpush2.msra.mxu0 0.0
        %901 = vmatprep.subr.mxu0 0.0
        %902 = vmatpush2.msra.mxu0 0.0
        %903 = vmatprep.subr.mxu0 0.0
        %904 = vmatpush2.msra.mxu0 0.0
        %905 = vmatprep.subr.mxu0 0.0
        %906 = vmatpush2.msra.mxu0 0.0
        %907 = vmatprep.subr.mxu0 0.0
        %908 = vmatpush2.msra.mxu0 0.0
        %909 = vmatprep.mubr.f32.mxu0 0.0
        %910 = vmatmul.mubr.f32.gmra.mxu0 %v730
        %v911 = vpop.f32.mrf.mxu0
        %v912 = vadd.f32 %v837, %v911
        %v913 = vpop.f32.mrf.mxu0
        %914 = vmatprep.mubr.f32.mxu0 0.0
        %915 = vmatmul.mubr.f32.gmra.mxu0 %v727
        %v916 = vpop.f32.mrf.mxu0
        %v917 = vadd.f32 %v842, %v916
        %v918 = vpop.f32.mrf.mxu0
        %919 = vdwg.mxu0
        %s920 = scalar_lea.vmem %s3, 256
        %v921 = vld [vmem:[%s920] sm:$0xff]
        %v922 = vld [vmem:[%s920 + $0x8] sm:$0xff]
        %v923 = vld [vmem:[%s920 + $0x10] sm:$0xff]
        %v924 = vld [vmem:[%s920 + $0x18] sm:$0xff]
        %v925 = vld [vmem:[%s920 + $0x20] sm:$0xff]
        %v926 = vld [vmem:[%s920 + $0x28] sm:$0xff]
        %v927 = vld [vmem:[%s920 + $0x30] sm:$0xff]
        %v928 = vld [vmem:[%s920 + $0x38] sm:$0xff]
        %v929 = vld [vmem:[%s920 + $0x40] sm:$0xff]
        %v930 = vld [vmem:[%s920 + $0x48] sm:$0xff]
        %v931 = vld [vmem:[%s920 + $0x50] sm:$0xff]
        %v932 = vld [vmem:[%s920 + $0x58] sm:$0xff]
        %v933 = vld [vmem:[%s920 + $0x60] sm:$0xff]
        %v934 = vld [vmem:[%s920 + $0x68] sm:$0xff]
        %v935 = vld [vmem:[%s920 + $0x70] sm:$0xff]
        %v936 = vld [vmem:[%s920 + $0x78] sm:$0xff]
        %937 = vmatprep.subr.mxu0 0.0
        %938 = vmatpush1.msra.mxu0 %v936
        %939 = vmatprep.subr.mxu0 0.0
        %940 = vmatpush1.msra.mxu0 %v935
        %941 = vmatprep.subr.mxu0 0.0
        %942 = vmatpush1.msra.mxu0 %v934
        %943 = vmatprep.subr.mxu0 0.0
        %944 = vmatpush1.msra.mxu0 %v933
        %945 = vmatprep.subr.mxu0 0.0
        %946 = vmatpush1.msra.mxu0 %v932
        %947 = vmatprep.subr.mxu0 0.0
        %948 = vmatpush1.msra.mxu0 %v931
        %949 = vmatprep.subr.mxu0 0.0
        %950 = vmatpush1.msra.mxu0 %v930
        %951 = vmatprep.subr.mxu0 0.0
        %952 = vmatpush1.msra.mxu0 %v929
        %953 = vmatprep.subr.mxu0 0.0
        %954 = vmatpush1.msra.mxu0 %v928
        %955 = vmatprep.subr.mxu0 0.0
        %956 = vmatpush1.msra.mxu0 %v927
        %957 = vmatprep.subr.mxu0 0.0
        %958 = vmatpush1.msra.mxu0 %v926
        %959 = vmatprep.subr.mxu0 0.0
        %960 = vmatpush1.msra.mxu0 %v925
        %961 = vmatprep.subr.mxu0 0.0
        %962 = vmatpush1.msra.mxu0 %v924
        %963 = vmatprep.subr.mxu0 0.0
        %964 = vmatpush1.msra.mxu0 %v923
        %965 = vmatprep.subr.mxu0 0.0
        %966 = vmatpush1.msra.mxu0 %v922
        %967 = vmatprep.subr.mxu0 0.0
        %968 = vmatpush1.msra.mxu0 %v921
        %969 = vmatprep.subr.mxu0 0.0
        %970 = vmatpush2.msra.mxu0 0.0
        %971 = vmatprep.subr.mxu0 0.0
        %972 = vmatpush2.msra.mxu0 0.0
        %973 = vmatprep.subr.mxu0 0.0
        %974 = vmatpush2.msra.mxu0 0.0
        %975 = vmatprep.subr.mxu0 0.0
        %976 = vmatpush2.msra.mxu0 0.0
        %977 = vmatprep.subr.mxu0 0.0
        %978 = vmatpush2.msra.mxu0 0.0
        %979 = vmatprep.subr.mxu0 0.0
        %980 = vmatpush2.msra.mxu0 0.0
        %981 = vmatprep.subr.mxu0 0.0
        %982 = vmatpush2.msra.mxu0 0.0
        %983 = vmatprep.subr.mxu0 0.0
        %984 = vmatpush2.msra.mxu0 0.0
        %985 = vmatprep.subr.mxu0 0.0
        %986 = vmatpush2.msra.mxu0 0.0
        %987 = vmatprep.subr.mxu0 0.0
        %988 = vmatpush2.msra.mxu0 0.0
        %989 = vmatprep.subr.mxu0 0.0
        %990 = vmatpush2.msra.mxu0 0.0
        %991 = vmatprep.subr.mxu0 0.0
        %992 = vmatpush2.msra.mxu0 0.0
        %993 = vmatprep.subr.mxu0 0.0
        %994 = vmatpush2.msra.mxu0 0.0
        %995 = vmatprep.subr.mxu0 0.0
        %996 = vmatpush2.msra.mxu0 0.0
        %997 = vmatprep.subr.mxu0 0.0
        %998 = vmatpush2.msra.mxu0 0.0
        %999 = vmatprep.subr.mxu0 0.0
        %1000 = vmatpush2.msra.mxu0 0.0
        %1001 = vmatprep.mubr.f32.mxu0 0.0
        %1002 = vmatmul.mubr.f32.gmra.mxu0 %v733
        %v1003 = vpop.f32.mrf.mxu0
        %v1004 = vadd.f32 0.0, %v1003
        %v1005 = vpop.f32.mrf.mxu0
        %1006 = vmatprep.mubr.f32.mxu0 0.0
        %1007 = vmatmul.mubr.f32.gmra.mxu0 %v736
        %v1008 = vpop.f32.mrf.mxu0
        %v1009 = vadd.f32 0.0, %v1008
        %v1010 = vpop.f32.mrf.mxu0
        %1011 = vdwg.mxu0
        %v1012 = vadd.f32 %v912, %v1004
        %v1013 = vadd.f32 %v917, %v1009
        %v1014 = vld [vmem:[%s4] sm:$0x1]
        %v1016 = vlaneseq
        %v1017 = vshrl.u32 %v1016, 7
        %v1018 = vsub.s32 0, %v1017
        %v1019 = vrot.slane %v1014, %v1018
        %v1021 = vadd.f32 %v1012, %v1019
        %v1022 = vadd.f32 %v1013, %v1019
        %v1023 = vmax.f32 %v1021, 0.0
        %v1024 = vmax.f32 %v1022, 0.0
        %1027 = vrot.lane.b32.xlu0 %v1023, 64
        %v1028 = vpop.permute.xlu0 %1027
        %1029 = vrot.lane.b32.xlu0 %v1024, 64
        %v1030 = vpop.permute.xlu0 %1029
        %v1033 = vmax.f32 %v1023, %v1028
        %v1034 = vmax.f32 %v1024, %v1030
        %v1037 = vcombine.high %v1033, %v1033
        %v1039 = vunpack.c.l.s4 1983009808
        %v1040 = vunpack.c.0.s8 %v1039
        %v1041 = vlaneseq
        %v1042 = vshrl.u32 %v1041, 7
        %v1043 = vsub.s32 %v1040, %v1042
        %v1044 = vrot.slane %v1033, %v1043
        %v1046 = vunpack.c.l.s4 1983009808
        %v1047 = vunpack.c.0.s8 %v1046
        %v1048 = vlaneseq
        %v1049 = vshrl.u32 %v1048, 7
        %v1050 = vsub.s32 %v1047, %v1049
        %v1051 = vrot.slane %v1037, %v1050
        %v1052 = vcombine.high %v1044, %v1044
        %v1053 = vcombine.high %v1051, %v1051
        %v1054 = vcombine.high %v1034, %v1034
        %v1056 = vunpack.c.l.s4 1983009808
        %v1057 = vunpack.c.0.s8 %v1056
        %v1058 = vlaneseq
        %v1059 = vshrl.u32 %v1058, 7
        %v1060 = vsub.s32 %v1057, %v1059
        %v1061 = vrot.slane %v1034, %v1060
        %v1063 = vunpack.c.l.s4 1983009808
        %v1064 = vunpack.c.0.s8 %v1063
        %v1065 = vlaneseq
        %v1066 = vshrl.u32 %v1065, 7
        %v1067 = vsub.s32 %v1064, %v1066
        %v1068 = vrot.slane %v1054, %v1067
        %v1069 = vcombine.high %v1061, %v1061
        %v1070 = vcombine.high %v1068, %v1068
        %v1079 = vrot.slane %v1044, 7
        %v1080 = vrot.slane %v1079, 2
        %v1081 = vrot.slane %v1052, 7
        %v1082 = vrot.slane %v1081, 2
        %v1083 = vrot.slane %v1051, 7
        %v1084 = vrot.slane %v1083, 2
        %v1085 = vrot.slane %v1053, 7
        %v1086 = vrot.slane %v1085, 2
        %v1087 = vrot.slane %v1061, 7
        %v1088 = vrot.slane %v1087, 2
        %v1089 = vrot.slane %v1069, 7
        %v1090 = vrot.slane %v1089, 2
        %v1091 = vrot.slane %v1068, 7
        %v1092 = vrot.slane %v1091, 2
        %v1093 = vrot.slane %v1070, 7
        %v1094 = vrot.slane %v1093, 2
        %v1103 = vmax.f32 %v1044, %v1080
        %v1104 = vmax.f32 %v1052, %v1082
        %v1105 = vmax.f32 %v1051, %v1084
        %v1106 = vmax.f32 %v1053, %v1086
        %v1107 = vmax.f32 %v1061, %v1088
        %v1108 = vmax.f32 %v1069, %v1090
        %v1109 = vmax.f32 %v1068, %v1092
        %v1110 = vmax.f32 %v1070, %v1094
        %v1118 = vlaneseq
        %v1119 = vshrl.u32 %v1118, 7
        %v1120 = vsub.s32 0, %v1119
        %v1121 = vrot.slane %v1103, %v1120
        %v1122 = vlaneseq
        %v1123 = vshrl.u32 %v1122, 7
        %v1124 = vsub.s32 0, %v1123
        %v1125 = vrot.slane %v1104, %v1124
        %v1126 = vlaneseq
        %v1127 = vshrl.u32 %v1126, 7
        %v1128 = vsub.s32 0, %v1127
        %v1129 = vrot.slane %v1105, %v1128
        %v1130 = vlaneseq
        %v1131 = vshrl.u32 %v1130, 7
        %v1132 = vsub.s32 0, %v1131
        %v1133 = vrot.slane %v1106, %v1132
        %v1134 = vlaneseq
        %v1135 = vshrl.u32 %v1134, 7
        %v1136 = vsub.s32 0, %v1135
        %v1137 = vrot.slane %v1107, %v1136
        %v1138 = vlaneseq
        %v1139 = vshrl.u32 %v1138, 7
        %v1140 = vsub.s32 0, %v1139
        %v1141 = vrot.slane %v1108, %v1140
        %v1142 = vlaneseq
        %v1143 = vshrl.u32 %v1142, 7
        %v1144 = vsub.s32 0, %v1143
        %v1145 = vrot.slane %v1109, %v1144
        %vm1146 = vcmask 1042434
        %v1147 = vsel %vm1146, %v1125, %v1121
        %vm1148 = vcmask 1043459
        %v1149 = vsel %vm1148, %v1129, %v1147
        %vm1150 = vcmask 1044484
        %v1151 = vsel %vm1150, %v1133, %v1149
        %vm1152 = vcmask 1045509
        %v1153 = vsel %vm1152, %v1137, %v1151
        %vm1154 = vcmask 1046534
        %v1155 = vsel %vm1154, %v1141, %v1153
        %vm1156 = vcmask 1047559
        %v1157 = vsel %vm1156, %v1145, %v1155
        %v1159 = vsel %vm432, 0.0, %v1157
        %v1161 = vlaneseq
        %v1162 = vshrl.u32 %v1161, 7
        %v1163 = vsub.s32 0, %v1162
        %v1164 = vrot.slane %v1110, %v1163
        %vm1165 = vcmask 1041409
        %v1166 = vsel %vm1165, %v1129, %v1125
        %v1167 = vsel %vm1146, %v1133, %v1166
        %v1168 = vsel %vm1148, %v1137, %v1167
        %v1169 = vsel %vm1150, %v1141, %v1168
        %v1170 = vsel %vm1152, %v1145, %v1169
        %v1171 = vsel %vm1154, %v1164, %v1170
        %v1173 = vsel %vm438, %v1171, 0.0
        %v1174 = vld [vmem:[#allocation5] sm:$0xff]
        %v1175 = vld [vmem:[#allocation5 + $0x8] sm:$0xff]
        %v1176 = vld [vmem:[#allocation5 + $0x10] sm:$0xff]
        %v1177 = vld [vmem:[#allocation5 + $0x18] sm:$0xff]
        %v1178 = vld [vmem:[#allocation5 + $0x20] sm:$0xff]
        %v1179 = vld [vmem:[#allocation5 + $0x28] sm:$0xff]
        %v1180 = vld [vmem:[#allocation5 + $0x30] sm:$0xff]
        %v1181 = vld [vmem:[#allocation5 + $0x38] sm:$0xff]
        %s1182 = scalar_lea.vmem [#allocation5], 64
        %v1183 = vld [vmem:[%s1182] sm:$0xff]
        %v1184 = vld [vmem:[%s1182 + $0x8] sm:$0xff]
        %v1185 = vld [vmem:[%s1182 + $0x10] sm:$0xff]
        %v1186 = vld [vmem:[%s1182 + $0x18] sm:$0xff]
        %v1187 = vld [vmem:[%s1182 + $0x20] sm:$0xff]
        %v1188 = vld [vmem:[%s1182 + $0x28] sm:$0xff]
        %v1189 = vld [vmem:[%s1182 + $0x30] sm:$0xff]
        %v1190 = vld [vmem:[%s1182 + $0x38] sm:$0xff]
        %v1191 = vsel %vm1165, %v1125, %v1121
        %v1192 = vsel %vm1146, %v1129, %v1191
        %v1193 = vsel %vm1148, %v1133, %v1192
        %v1194 = vsel %vm1150, %v1137, %v1193
        %v1195 = vsel %vm1152, %v1141, %v1194
        %v1196 = vsel %vm1154, %v1145, %v1195
        %v1197 = vsel %vm1156, %v1164, %v1196
        %v1198 = vsel %vm461, %v1197, 0
        %1200 = vmatprep.subr.mxu0 0.0
        %1201 = vmatpush1.msra.mxu0 0.0
        %1202 = vmatprep.subr.mxu0 0.0
        %1203 = vmatpush1.msra.mxu0 0.0
        %1204 = vmatprep.subr.mxu0 0.0
        %1205 = vmatpush1.msra.mxu0 0.0
        %1206 = vmatprep.subr.mxu0 0.0
        %1207 = vmatpush1.msra.mxu0 0.0
        %1208 = vmatprep.subr.mxu0 0.0
        %1209 = vmatpush1.msra.mxu0 0.0
        %1210 = vmatprep.subr.mxu0 0.0
        %1211 = vmatpush1.msra.mxu0 0.0
        %1212 = vmatprep.subr.mxu0 0.0
        %1213 = vmatpush1.msra.mxu0 0.0
        %1214 = vmatprep.subr.mxu0 0.0
        %1215 = vmatpush1.msra.mxu0 0.0
        %1216 = vmatprep.subr.mxu0 0.0
        %1217 = vmatpush1.msra.mxu0 %v1190
        %1218 = vmatprep.subr.mxu0 0.0
        %1219 = vmatpush1.msra.mxu0 %v1189
        %1220 = vmatprep.subr.mxu0 0.0
        %1221 = vmatpush1.msra.mxu0 %v1188
        %1222 = vmatprep.subr.mxu0 0.0
        %1223 = vmatpush1.msra.mxu0 %v1187
        %1224 = vmatprep.subr.mxu0 0.0
        %1225 = vmatpush1.msra.mxu0 %v1186
        %1226 = vmatprep.subr.mxu0 0.0
        %1227 = vmatpush1.msra.mxu0 %v1185
        %1228 = vmatprep.subr.mxu0 0.0
        %1229 = vmatpush1.msra.mxu0 %v1184
        %1230 = vmatprep.subr.mxu0 0.0
        %1231 = vmatpush1.msra.mxu0 %v1183
        %1232 = vmatprep.subr.mxu0 0.0
        %1233 = vmatpush2.msra.mxu0 0.0
        %1234 = vmatprep.subr.mxu0 0.0
        %1235 = vmatpush2.msra.mxu0 0.0
        %1236 = vmatprep.subr.mxu0 0.0
        %1237 = vmatpush2.msra.mxu0 0.0
        %1238 = vmatprep.subr.mxu0 0.0
        %1239 = vmatpush2.msra.mxu0 0.0
        %1240 = vmatprep.subr.mxu0 0.0
        %1241 = vmatpush2.msra.mxu0 0.0
        %1242 = vmatprep.subr.mxu0 0.0
        %1243 = vmatpush2.msra.mxu0 0.0
        %1244 = vmatprep.subr.mxu0 0.0
        %1245 = vmatpush2.msra.mxu0 0.0
        %1246 = vmatprep.subr.mxu0 0.0
        %1247 = vmatpush2.msra.mxu0 0.0
        %1248 = vmatprep.subr.mxu0 0.0
        %1249 = vmatpush2.msra.mxu0 0.0
        %1250 = vmatprep.subr.mxu0 0.0
        %1251 = vmatpush2.msra.mxu0 0.0
        %1252 = vmatprep.subr.mxu0 0.0
        %1253 = vmatpush2.msra.mxu0 0.0
        %1254 = vmatprep.subr.mxu0 0.0
        %1255 = vmatpush2.msra.mxu0 0.0
        %1256 = vmatprep.subr.mxu0 0.0
        %1257 = vmatpush2.msra.mxu0 0.0
        %1258 = vmatprep.subr.mxu0 0.0
        %1259 = vmatpush2.msra.mxu0 0.0
        %1260 = vmatprep.subr.mxu0 0.0
        %1261 = vmatpush2.msra.mxu0 0.0
        %1262 = vmatprep.subr.mxu0 0.0
        %1263 = vmatpush2.msra.mxu0 0.0
        %1264 = vmatprep.mubr.f32.mxu0 0.0
        %1265 = vmatmul.mubr.f32.gmra.mxu0 %v1198
        %v1266 = vpop.f32.mrf.mxu0
        %v1267 = vadd.f32 0.0, %v1266
        %v1268 = vpop.f32.mrf.mxu0
        %1269 = vdwg.mxu0
        %v1271 = vsel %vm461, %v1159, 0
        %1273 = vmatprep.subr.mxu0 0.0
        %1274 = vmatpush1.msra.mxu0 0.0
        %1275 = vmatprep.subr.mxu0 0.0
        %1276 = vmatpush1.msra.mxu0 0.0
        %1277 = vmatprep.subr.mxu0 0.0
        %1278 = vmatpush1.msra.mxu0 0.0
        %1279 = vmatprep.subr.mxu0 0.0
        %1280 = vmatpush1.msra.mxu0 0.0
        %1281 = vmatprep.subr.mxu0 0.0
        %1282 = vmatpush1.msra.mxu0 0.0
        %1283 = vmatprep.subr.mxu0 0.0
        %1284 = vmatpush1.msra.mxu0 0.0
        %1285 = vmatprep.subr.mxu0 0.0
        %1286 = vmatpush1.msra.mxu0 0.0
        %1287 = vmatprep.subr.mxu0 0.0
        %1288 = vmatpush1.msra.mxu0 0.0
        %1289 = vmatprep.subr.mxu0 0.0
        %1290 = vmatpush1.msra.mxu0 %v1181
        %1291 = vmatprep.subr.mxu0 0.0
        %1292 = vmatpush1.msra.mxu0 %v1180
        %1293 = vmatprep.subr.mxu0 0.0
        %1294 = vmatpush1.msra.mxu0 %v1179
        %1295 = vmatprep.subr.mxu0 0.0
        %1296 = vmatpush1.msra.mxu0 %v1178
        %1297 = vmatprep.subr.mxu0 0.0
        %1298 = vmatpush1.msra.mxu0 %v1177
        %1299 = vmatprep.subr.mxu0 0.0
        %1300 = vmatpush1.msra.mxu0 %v1176
        %1301 = vmatprep.subr.mxu0 0.0
        %1302 = vmatpush1.msra.mxu0 %v1175
        %1303 = vmatprep.subr.mxu0 0.0
        %1304 = vmatpush1.msra.mxu0 %v1174
        %1305 = vmatprep.subr.mxu0 0.0
        %1306 = vmatpush2.msra.mxu0 0.0
        %1307 = vmatprep.subr.mxu0 0.0
        %1308 = vmatpush2.msra.mxu0 0.0
        %1309 = vmatprep.subr.mxu0 0.0
        %1310 = vmatpush2.msra.mxu0 0.0
        %1311 = vmatprep.subr.mxu0 0.0
        %1312 = vmatpush2.msra.mxu0 0.0
        %1313 = vmatprep.subr.mxu0 0.0
        %1314 = vmatpush2.msra.mxu0 0.0
        %1315 = vmatprep.subr.mxu0 0.0
        %1316 = vmatpush2.msra.mxu0 0.0
        %1317 = vmatprep.subr.mxu0 0.0
        %1318 = vmatpush2.msra.mxu0 0.0
        %1319 = vmatprep.subr.mxu0 0.0
        %1320 = vmatpush2.msra.mxu0 0.0
        %1321 = vmatprep.subr.mxu0 0.0
        %1322 = vmatpush2.msra.mxu0 0.0
        %1323 = vmatprep.subr.mxu0 0.0
        %1324 = vmatpush2.msra.mxu0 0.0
        %1325 = vmatprep.subr.mxu0 0.0
        %1326 = vmatpush2.msra.mxu0 0.0
        %1327 = vmatprep.subr.mxu0 0.0
        %1328 = vmatpush2.msra.mxu0 0.0
        %1329 = vmatprep.subr.mxu0 0.0
        %1330 = vmatpush2.msra.mxu0 0.0
        %1331 = vmatprep.subr.mxu0 0.0
        %1332 = vmatpush2.msra.mxu0 0.0
        %1333 = vmatprep.subr.mxu0 0.0
        %1334 = vmatpush2.msra.mxu0 0.0
        %1335 = vmatprep.subr.mxu0 0.0
        %1336 = vmatpush2.msra.mxu0 0.0
        %1337 = vmatprep.mubr.f32.mxu0 0.0
        %1338 = vmatmul.mubr.f32.gmra.mxu0 %v1271
        %v1339 = vpop.f32.mrf.mxu0
        %v1340 = vadd.f32 %v1267, %v1339
        %v1341 = vpop.f32.mrf.mxu0
        %1342 = vdwg.mxu0
        %s1343 = scalar_lea.vmem [#allocation5], 128
        %v1344 = vld [vmem:[%s1343] sm:$0xff]
        %v1345 = vld [vmem:[%s1343 + $0x8] sm:$0xff]
        %v1346 = vld [vmem:[%s1343 + $0x10] sm:$0xff]
        %v1347 = vld [vmem:[%s1343 + $0x18] sm:$0xff]
        %v1348 = vld [vmem:[%s1343 + $0x20] sm:$0xff]
        %v1349 = vld [vmem:[%s1343 + $0x28] sm:$0xff]
        %v1350 = vld [vmem:[%s1343 + $0x30] sm:$0xff]
        %v1351 = vld [vmem:[%s1343 + $0x38] sm:$0xff]
        %v1353 = vsel %vm461, %v1173, 0
        %1355 = vmatprep.subr.mxu0 0.0
        %1356 = vmatpush1.msra.mxu0 0.0
        %1357 = vmatprep.subr.mxu0 0.0
        %1358 = vmatpush1.msra.mxu0 0.0
        %1359 = vmatprep.subr.mxu0 0.0
        %1360 = vmatpush1.msra.mxu0 0.0
        %1361 = vmatprep.subr.mxu0 0.0
        %1362 = vmatpush1.msra.mxu0 0.0
        %1363 = vmatprep.subr.mxu0 0.0
        %1364 = vmatpush1.msra.mxu0 0.0
        %1365 = vmatprep.subr.mxu0 0.0
        %1366 = vmatpush1.msra.mxu0 0.0
        %1367 = vmatprep.subr.mxu0 0.0
        %1368 = vmatpush1.msra.mxu0 0.0
        %1369 = vmatprep.subr.mxu0 0.0
        %1370 = vmatpush1.msra.mxu0 0.0
        %1371 = vmatprep.subr.mxu0 0.0
        %1372 = vmatpush1.msra.mxu0 %v1351
        %1373 = vmatprep.subr.mxu0 0.0
        %1374 = vmatpush1.msra.mxu0 %v1350
        %1375 = vmatprep.subr.mxu0 0.0
        %1376 = vmatpush1.msra.mxu0 %v1349
        %1377 = vmatprep.subr.mxu0 0.0
        %1378 = vmatpush1.msra.mxu0 %v1348
        %1379 = vmatprep.subr.mxu0 0.0
        %1380 = vmatpush1.msra.mxu0 %v1347
        %1381 = vmatprep.subr.mxu0 0.0
        %1382 = vmatpush1.msra.mxu0 %v1346
        %1383 = vmatprep.subr.mxu0 0.0
        %1384 = vmatpush1.msra.mxu0 %v1345
        %1385 = vmatprep.subr.mxu0 0.0
        %1386 = vmatpush1.msra.mxu0 %v1344
        %1387 = vmatprep.subr.mxu0 0.0
        %1388 = vmatpush2.msra.mxu0 0.0
        %1389 = vmatprep.subr.mxu0 0.0
        %1390 = vmatpush2.msra.mxu0 0.0
        %1391 = vmatprep.subr.mxu0 0.0
        %1392 = vmatpush2.msra.mxu0 0.0
        %1393 = vmatprep.subr.mxu0 0.0
        %1394 = vmatpush2.msra.mxu0 0.0
        %1395 = vmatprep.subr.mxu0 0.0
        %1396 = vmatpush2.msra.mxu0 0.0
        %1397 = vmatprep.subr.mxu0 0.0
        %1398 = vmatpush2.msra.mxu0 0.0
        %1399 = vmatprep.subr.mxu0 0.0
        %1400 = vmatpush2.msra.mxu0 0.0
        %1401 = vmatprep.subr.mxu0 0.0
        %1402 = vmatpush2.msra.mxu0 0.0
        %1403 = vmatprep.subr.mxu0 0.0
        %1404 = vmatpush2.msra.mxu0 0.0
        %1405 = vmatprep.subr.mxu0 0.0
        %1406 = vmatpush2.msra.mxu0 0.0
        %1407 = vmatprep.subr.mxu0 0.0
        %1408 = vmatpush2.msra.mxu0 0.0
        %1409 = vmatprep.subr.mxu0 0.0
        %1410 = vmatpush2.msra.mxu0 0.0
        %1411 = vmatprep.subr.mxu0 0.0
        %1412 = vmatpush2.msra.mxu0 0.0
        %1413 = vmatprep.subr.mxu0 0.0
        %1414 = vmatpush2.msra.mxu0 0.0
        %1415 = vmatprep.subr.mxu0 0.0
        %1416 = vmatpush2.msra.mxu0 0.0
        %1417 = vmatprep.subr.mxu0 0.0
        %1418 = vmatpush2.msra.mxu0 0.0
        %1419 = vmatprep.mubr.f32.mxu0 0.0
        %1420 = vmatmul.mubr.f32.gmra.mxu0 %v1353
        %v1421 = vpop.f32.mrf.mxu0
        %v1422 = vadd.f32 0.0, %v1421
        %v1423 = vpop.f32.mrf.mxu0
        %1424 = vdwg.mxu0
        %v1425 = vadd.f32 %v1340, %v1422
        %v1426 = vld [vmem:[%s6] sm:$0x1]
        %v1428 = vlaneseq
        %v1429 = vshrl.u32 %v1428, 7
        %v1430 = vsub.s32 0, %v1429
        %v1431 = vrot.slane %v1426, %v1430
        %v1433 = vadd.f32 %v1425, %v1431
        %v1434 = vmax.f32 %v1433, 0.0
        %v1436 = vrot.slane %v1434, 7
        %v1438 = vsel %vm432, 0.0, %v1436
        %v1439 = vrot.slane %v1434, 1
        %v1441 = vsel %vm438, %v1439, 0.0
        %v1442 = vld [vmem:[#allocation7] sm:$0xff]
        %v1443 = vld [vmem:[#allocation7 + $0x8] sm:$0xff]
        %v1444 = vld [vmem:[#allocation7 + $0x10] sm:$0xff]
        %v1445 = vld [vmem:[#allocation7 + $0x18] sm:$0xff]
        %v1446 = vld [vmem:[#allocation7 + $0x20] sm:$0xff]
        %v1447 = vld [vmem:[#allocation7 + $0x28] sm:$0xff]
        %v1448 = vld [vmem:[#allocation7 + $0x30] sm:$0xff]
        %v1449 = vld [vmem:[#allocation7 + $0x38] sm:$0xff]
        %s1450 = scalar_lea.vmem [#allocation7], 64
        %v1451 = vld [vmem:[%s1450] sm:$0xff]
        %v1452 = vld [vmem:[%s1450 + $0x8] sm:$0xff]
        %v1453 = vld [vmem:[%s1450 + $0x10] sm:$0xff]
        %v1454 = vld [vmem:[%s1450 + $0x18] sm:$0xff]
        %v1455 = vld [vmem:[%s1450 + $0x20] sm:$0xff]
        %v1456 = vld [vmem:[%s1450 + $0x28] sm:$0xff]
        %v1457 = vld [vmem:[%s1450 + $0x30] sm:$0xff]
        %v1458 = vld [vmem:[%s1450 + $0x38] sm:$0xff]
        %v1459 = vsel %vm461, %v1434, 0
        %1461 = vmatprep.subr.mxu0 0.0
        %1462 = vmatpush1.msra.mxu0 0.0
        %1463 = vmatprep.subr.mxu0 0.0
        %1464 = vmatpush1.msra.mxu0 0.0
        %1465 = vmatprep.subr.mxu0 0.0
        %1466 = vmatpush1.msra.mxu0 0.0
        %1467 = vmatprep.subr.mxu0 0.0
        %1468 = vmatpush1.msra.mxu0 0.0
        %1469 = vmatprep.subr.mxu0 0.0
        %1470 = vmatpush1.msra.mxu0 0.0
        %1471 = vmatprep.subr.mxu0 0.0
        %1472 = vmatpush1.msra.mxu0 0.0
        %1473 = vmatprep.subr.mxu0 0.0
        %1474 = vmatpush1.msra.mxu0 0.0
        %1475 = vmatprep.subr.mxu0 0.0
        %1476 = vmatpush1.msra.mxu0 0.0
        %1477 = vmatprep.subr.mxu0 0.0
        %1478 = vmatpush1.msra.mxu0 %v1458
        %1479 = vmatprep.subr.mxu0 0.0
        %1480 = vmatpush1.msra.mxu0 %v1457
        %1481 = vmatprep.subr.mxu0 0.0
        %1482 = vmatpush1.msra.mxu0 %v1456
        %1483 = vmatprep.subr.mxu0 0.0
        %1484 = vmatpush1.msra.mxu0 %v1455
        %1485 = vmatprep.subr.mxu0 0.0
        %1486 = vmatpush1.msra.mxu0 %v1454
        %1487 = vmatprep.subr.mxu0 0.0
        %1488 = vmatpush1.msra.mxu0 %v1453
        %1489 = vmatprep.subr.mxu0 0.0
        %1490 = vmatpush1.msra.mxu0 %v1452
        %1491 = vmatprep.subr.mxu0 0.0
        %1492 = vmatpush1.msra.mxu0 %v1451
        %1493 = vmatprep.subr.mxu0 0.0
        %1494 = vmatpush2.msra.mxu0 0.0
        %1495 = vmatprep.subr.mxu0 0.0
        %1496 = vmatpush2.msra.mxu0 0.0
        %1497 = vmatprep.subr.mxu0 0.0
        %1498 = vmatpush2.msra.mxu0 0.0
        %1499 = vmatprep.subr.mxu0 0.0
        %1500 = vmatpush2.msra.mxu0 0.0
        %1501 = vmatprep.subr.mxu0 0.0
        %1502 = vmatpush2.msra.mxu0 0.0
        %1503 = vmatprep.subr.mxu0 0.0
        %1504 = vmatpush2.msra.mxu0 0.0
        %1505 = vmatprep.subr.mxu0 0.0
        %1506 = vmatpush2.msra.mxu0 0.0
        %1507 = vmatprep.subr.mxu0 0.0
        %1508 = vmatpush2.msra.mxu0 0.0
        %1509 = vmatprep.subr.mxu0 0.0
        %1510 = vmatpush2.msra.mxu0 0.0
        %1511 = vmatprep.subr.mxu0 0.0
        %1512 = vmatpush2.msra.mxu0 0.0
        %1513 = vmatprep.subr.mxu0 0.0
        %1514 = vmatpush2.msra.mxu0 0.0
        %1515 = vmatprep.subr.mxu0 0.0
        %1516 = vmatpush2.msra.mxu0 0.0
        %1517 = vmatprep.subr.mxu0 0.0
        %1518 = vmatpush2.msra.mxu0 0.0
        %1519 = vmatprep.subr.mxu0 0.0
        %1520 = vmatpush2.msra.mxu0 0.0
        %1521 = vmatprep.subr.mxu0 0.0
        %1522 = vmatpush2.msra.mxu0 0.0
        %1523 = vmatprep.subr.mxu0 0.0
        %1524 = vmatpush2.msra.mxu0 0.0
        %1525 = vmatprep.mubr.f32.mxu0 0.0
        %1526 = vmatmul.mubr.f32.gmra.mxu0 %v1459
        %v1527 = vpop.f32.mrf.mxu0
        %v1528 = vadd.f32 0.0, %v1527
        %v1529 = vpop.f32.mrf.mxu0
        %1530 = vdwg.mxu0
        %v1532 = vsel %vm461, %v1438, 0
        %1534 = vmatprep.subr.mxu0 0.0
        %1535 = vmatpush1.msra.mxu0 0.0
        %1536 = vmatprep.subr.mxu0 0.0
        %1537 = vmatpush1.msra.mxu0 0.0
        %1538 = vmatprep.subr.mxu0 0.0
        %1539 = vmatpush1.msra.mxu0 0.0
        %1540 = vmatprep.subr.mxu0 0.0
        %1541 = vmatpush1.msra.mxu0 0.0
        %1542 = vmatprep.subr.mxu0 0.0
        %1543 = vmatpush1.msra.mxu0 0.0
        %1544 = vmatprep.subr.mxu0 0.0
        %1545 = vmatpush1.msra.mxu0 0.0
        %1546 = vmatprep.subr.mxu0 0.0
        %1547 = vmatpush1.msra.mxu0 0.0
        %1548 = vmatprep.subr.mxu0 0.0
        %1549 = vmatpush1.msra.mxu0 0.0
        %1550 = vmatprep.subr.mxu0 0.0
        %1551 = vmatpush1.msra.mxu0 %v1449
        %1552 = vmatprep.subr.mxu0 0.0
        %1553 = vmatpush1.msra.mxu0 %v1448
        %1554 = vmatprep.subr.mxu0 0.0
        %1555 = vmatpush1.msra.mxu0 %v1447
        %1556 = vmatprep.subr.mxu0 0.0
        %1557 = vmatpush1.msra.mxu0 %v1446
        %1558 = vmatprep.subr.mxu0 0.0
        %1559 = vmatpush1.msra.mxu0 %v1445
        %1560 = vmatprep.subr.mxu0 0.0
        %1561 = vmatpush1.msra.mxu0 %v1444
        %1562 = vmatprep.subr.mxu0 0.0
        %1563 = vmatpush1.msra.mxu0 %v1443
        %1564 = vmatprep.subr.mxu0 0.0
        %1565 = vmatpush1.msra.mxu0 %v1442
        %1566 = vmatprep.subr.mxu0 0.0
        %1567 = vmatpush2.msra.mxu0 0.0
        %1568 = vmatprep.subr.mxu0 0.0
        %1569 = vmatpush2.msra.mxu0 0.0
        %1570 = vmatprep.subr.mxu0 0.0
        %1571 = vmatpush2.msra.mxu0 0.0
        %1572 = vmatprep.subr.mxu0 0.0
        %1573 = vmatpush2.msra.mxu0 0.0
        %1574 = vmatprep.subr.mxu0 0.0
        %1575 = vmatpush2.msra.mxu0 0.0
        %1576 = vmatprep.subr.mxu0 0.0
        %1577 = vmatpush2.msra.mxu0 0.0
        %1578 = vmatprep.subr.mxu0 0.0
        %1579 = vmatpush2.msra.mxu0 0.0
        %1580 = vmatprep.subr.mxu0 0.0
        %1581 = vmatpush2.msra.mxu0 0.0
        %1582 = vmatprep.subr.mxu0 0.0
        %1583 = vmatpush2.msra.mxu0 0.0
        %1584 = vmatprep.subr.mxu0 0.0
        %1585 = vmatpush2.msra.mxu0 0.0
        %1586 = vmatprep.subr.mxu0 0.0
        %1587 = vmatpush2.msra.mxu0 0.0
        %1588 = vmatprep.subr.mxu0 0.0
        %1589 = vmatpush2.msra.mxu0 0.0
        %1590 = vmatprep.subr.mxu0 0.0
        %1591 = vmatpush2.msra.mxu0 0.0
        %1592 = vmatprep.subr.mxu0 0.0
        %1593 = vmatpush2.msra.mxu0 0.0
        %1594 = vmatprep.subr.mxu0 0.0
        %1595 = vmatpush2.msra.mxu0 0.0
        %1596 = vmatprep.subr.mxu0 0.0
        %1597 = vmatpush2.msra.mxu0 0.0
        %1598 = vmatprep.mubr.f32.mxu0 0.0
        %1599 = vmatmul.mubr.f32.gmra.mxu0 %v1532
        %v1600 = vpop.f32.mrf.mxu0
        %v1601 = vadd.f32 %v1528, %v1600
        %v1602 = vpop.f32.mrf.mxu0
        %1603 = vdwg.mxu0
        %s1604 = scalar_lea.vmem [#allocation7], 128
        %v1605 = vld [vmem:[%s1604] sm:$0xff]
        %v1606 = vld [vmem:[%s1604 + $0x8] sm:$0xff]
        %v1607 = vld [vmem:[%s1604 + $0x10] sm:$0xff]
        %v1608 = vld [vmem:[%s1604 + $0x18] sm:$0xff]
        %v1609 = vld [vmem:[%s1604 + $0x20] sm:$0xff]
        %v1610 = vld [vmem:[%s1604 + $0x28] sm:$0xff]
        %v1611 = vld [vmem:[%s1604 + $0x30] sm:$0xff]
        %v1612 = vld [vmem:[%s1604 + $0x38] sm:$0xff]
        %v1614 = vsel %vm461, %v1441, 0
        %1616 = vmatprep.subr.mxu0 0.0
        %1617 = vmatpush1.msra.mxu0 0.0
        %1618 = vmatprep.subr.mxu0 0.0
        %1619 = vmatpush1.msra.mxu0 0.0
        %1620 = vmatprep.subr.mxu0 0.0
        %1621 = vmatpush1.msra.mxu0 0.0
        %1622 = vmatprep.subr.mxu0 0.0
        %1623 = vmatpush1.msra.mxu0 0.0
        %1624 = vmatprep.subr.mxu0 0.0
        %1625 = vmatpush1.msra.mxu0 0.0
        %1626 = vmatprep.subr.mxu0 0.0
        %1627 = vmatpush1.msra.mxu0 0.0
        %1628 = vmatprep.subr.mxu0 0.0
        %1629 = vmatpush1.msra.mxu0 0.0
        %1630 = vmatprep.subr.mxu0 0.0
        %1631 = vmatpush1.msra.mxu0 0.0
        %1632 = vmatprep.subr.mxu0 0.0
        %1633 = vmatpush1.msra.mxu0 %v1612
        %1634 = vmatprep.subr.mxu0 0.0
        %1635 = vmatpush1.msra.mxu0 %v1611
        %1636 = vmatprep.subr.mxu0 0.0
        %1637 = vmatpush1.msra.mxu0 %v1610
        %1638 = vmatprep.subr.mxu0 0.0
        %1639 = vmatpush1.msra.mxu0 %v1609
        %1640 = vmatprep.subr.mxu0 0.0
        %1641 = vmatpush1.msra.mxu0 %v1608
        %1642 = vmatprep.subr.mxu0 0.0
        %1643 = vmatpush1.msra.mxu0 %v1607
        %1644 = vmatprep.subr.mxu0 0.0
        %1645 = vmatpush1.msra.mxu0 %v1606
        %1646 = vmatprep.subr.mxu0 0.0
        %1647 = vmatpush1.msra.mxu0 %v1605
        %1648 = vmatprep.subr.mxu0 0.0
        %1649 = vmatpush2.msra.mxu0 0.0
        %1650 = vmatprep.subr.mxu0 0.0
        %1651 = vmatpush2.msra.mxu0 0.0
        %1652 = vmatprep.subr.mxu0 0.0
        %1653 = vmatpush2.msra.mxu0 0.0
        %1654 = vmatprep.subr.mxu0 0.0
        %1655 = vmatpush2.msra.mxu0 0.0
        %1656 = vmatprep.subr.mxu0 0.0
        %1657 = vmatpush2.msra.mxu0 0.0
        %1658 = vmatprep.subr.mxu0 0.0
        %1659 = vmatpush2.msra.mxu0 0.0
        %1660 = vmatprep.subr.mxu0 0.0
        %1661 = vmatpush2.msra.mxu0 0.0
        %1662 = vmatprep.subr.mxu0 0.0
        %1663 = vmatpush2.msra.mxu0 0.0
        %1664 = vmatprep.subr.mxu0 0.0
        %1665 = vmatpush2.msra.mxu0 0.0
        %1666 = vmatprep.subr.mxu0 0.0
        %1667 = vmatpush2.msra.mxu0 0.0
        %1668 = vmatprep.subr.mxu0 0.0
        %1669 = vmatpush2.msra.mxu0 0.0
        %1670 = vmatprep.subr.mxu0 0.0
        %1671 = vmatpush2.msra.mxu0 0.0
        %1672 = vmatprep.subr.mxu0 0.0
        %1673 = vmatpush2.msra.mxu0 0.0
        %1674 = vmatprep.subr.mxu0 0.0
        %1675 = vmatpush2.msra.mxu0 0.0
        %1676 = vmatprep.subr.mxu0 0.0
        %1677 = vmatpush2.msra.mxu0 0.0
        %1678 = vmatprep.subr.mxu0 0.0
        %1679 = vmatpush2.msra.mxu0 0.0
        %1680 = vmatprep.mubr.f32.mxu0 0.0
        %1681 = vmatmul.mubr.f32.gmra.mxu0 %v1614
        %v1682 = vpop.f32.mrf.mxu0
        %v1683 = vadd.f32 0.0, %v1682
        %v1684 = vpop.f32.mrf.mxu0
        %1685 = vdwg.mxu0
        %v1686 = vadd.f32 %v1601, %v1683
        %v1687 = vld [vmem:[%s8] sm:$0x1]
        %v1689 = vlaneseq
        %v1690 = vshrl.u32 %v1689, 7
        %v1691 = vsub.s32 0, %v1690
        %v1692 = vrot.slane %v1687, %v1691
        %v1694 = vadd.f32 %v1686, %v1692
        %v1695 = vmax.f32 %v1694, 0.0
        %1697 = vrot.lane.b32.xlu0 %v1695, 96
        %v1698 = vpop.permute.xlu0 %1697
        %v1700 = vmax.f32 %v1695, %v1698
        %v1702 = vcombine.high %v1700, %v1700
        %v1704 = vunpack.c.l.s4 1983009808
        %v1705 = vunpack.c.0.s8 %v1704
        %v1706 = vlaneseq
        %v1707 = vshrl.u32 %v1706, 7
        %v1708 = vsub.s32 %v1705, %v1707
        %v1709 = vrot.slane %v1700, %v1708
        %v1711 = vunpack.c.l.s4 1983009808
        %v1712 = vunpack.c.0.s8 %v1711
        %v1713 = vlaneseq
        %v1714 = vshrl.u32 %v1713, 7
        %v1715 = vsub.s32 %v1712, %v1714
        %v1716 = vrot.slane %v1702, %v1715
        %v1717 = vcombine.high %v1709, %v1709
        %v1718 = vcombine.high %v1716, %v1716
        %v1723 = vrot.slane %v1709, 7
        %v1724 = vrot.slane %v1723, 2
        %v1725 = vrot.slane %v1717, 7
        %v1726 = vrot.slane %v1725, 2
        %v1727 = vrot.slane %v1716, 7
        %v1728 = vrot.slane %v1727, 2
        %v1729 = vrot.slane %v1718, 7
        %v1730 = vrot.slane %v1729, 2
        %v1735 = vmax.f32 %v1709, %v1724
        %v1736 = vmax.f32 %v1717, %v1726
        %v1737 = vmax.f32 %v1716, %v1728
        %v1738 = vmax.f32 %v1718, %v1730
        %v1739 = vld [vmem:[%s10] sm:$0x1]
        %v1740 = vld [vmem:[%s9] sm:$0xff]
        %v1741 = vld [vmem:[%s9 + $0x8] sm:$0xff]
        %v1742 = vld [vmem:[%s9 + $0x10] sm:$0xff]
        %v1743 = vld [vmem:[%s9 + $0x18] sm:$0xff]
        %vm1744 = vcmask 261120
        %v1746 = vsel %vm1744, %v1735, 0
        %1748 = vmatprep.subr.mxu0 0.0
        %1749 = vmatpush1.msra.mxu0 0.0
        %1750 = vmatprep.subr.mxu0 0.0
        %1751 = vmatpush1.msra.mxu0 0.0
        %1752 = vmatprep.subr.mxu0 0.0
        %1753 = vmatpush1.msra.mxu0 0.0
        %1754 = vmatprep.subr.mxu0 0.0
        %1755 = vmatpush1.msra.mxu0 0.0
        %1756 = vmatprep.subr.mxu0 0.0
        %1757 = vmatpush1.msra.mxu0 0.0
        %1758 = vmatprep.subr.mxu0 0.0
        %1759 = vmatpush1.msra.mxu0 0.0
        %1760 = vmatprep.subr.mxu0 0.0
        %1761 = vmatpush1.msra.mxu0 0.0
        %1762 = vmatprep.subr.mxu0 0.0
        %1763 = vmatpush1.msra.mxu0 0.0
        %1764 = vmatprep.subr.mxu0 0.0
        %1765 = vmatpush1.msra.mxu0 0.0
        %1766 = vmatprep.subr.mxu0 0.0
        %1767 = vmatpush1.msra.mxu0 0.0
        %1768 = vmatprep.subr.mxu0 0.0
        %1769 = vmatpush1.msra.mxu0 0.0
        %1770 = vmatprep.subr.mxu0 0.0
        %1771 = vmatpush1.msra.mxu0 0.0
        %1772 = vmatprep.subr.mxu0 0.0
        %1773 = vmatpush1.msra.mxu0 %v1743
        %1774 = vmatprep.subr.mxu0 0.0
        %1775 = vmatpush1.msra.mxu0 %v1742
        %1776 = vmatprep.subr.mxu0 0.0
        %1777 = vmatpush1.msra.mxu0 %v1741
        %1778 = vmatprep.subr.mxu0 0.0
        %1779 = vmatpush1.msra.mxu0 %v1740
        %1780 = vmatprep.subr.mxu0 0.0
        %1781 = vmatpush2.msra.mxu0 0.0
        %1782 = vmatprep.subr.mxu0 0.0
        %1783 = vmatpush2.msra.mxu0 0.0
        %1784 = vmatprep.subr.mxu0 0.0
        %1785 = vmatpush2.msra.mxu0 0.0
        %1786 = vmatprep.subr.mxu0 0.0
        %1787 = vmatpush2.msra.mxu0 0.0
        %1788 = vmatprep.subr.mxu0 0.0
        %1789 = vmatpush2.msra.mxu0 0.0
        %1790 = vmatprep.subr.mxu0 0.0
        %1791 = vmatpush2.msra.mxu0 0.0
        %1792 = vmatprep.subr.mxu0 0.0
        %1793 = vmatpush2.msra.mxu0 0.0
        %1794 = vmatprep.subr.mxu0 0.0
        %1795 = vmatpush2.msra.mxu0 0.0
        %1796 = vmatprep.subr.mxu0 0.0
        %1797 = vmatpush2.msra.mxu0 0.0
        %1798 = vmatprep.subr.mxu0 0.0
        %1799 = vmatpush2.msra.mxu0 0.0
        %1800 = vmatprep.subr.mxu0 0.0
        %1801 = vmatpush2.msra.mxu0 0.0
        %1802 = vmatprep.subr.mxu0 0.0
        %1803 = vmatpush2.msra.mxu0 0.0
        %1804 = vmatprep.subr.mxu0 0.0
        %1805 = vmatpush2.msra.mxu0 0.0
        %1806 = vmatprep.subr.mxu0 0.0
        %1807 = vmatpush2.msra.mxu0 0.0
        %1808 = vmatprep.subr.mxu0 0.0
        %1809 = vmatpush2.msra.mxu0 0.0
        %1810 = vmatprep.subr.mxu0 0.0
        %1811 = vmatpush2.msra.mxu0 0.0
        %1812 = vmatprep.mubr.f32.mxu0 0.0
        %1813 = vmatmul.mubr.f32.gmra.mxu0 %v1746
        %v1814 = vpop.f32.mrf.mxu0
        %v1815 = vadd.f32 0.0, %v1814
        %v1816 = vpop.f32.mrf.mxu0
        %1817 = vdwg.mxu0
        %v1818 = vadd.f32 %v1739, %v1815
        %s1819 = scalar_lea.vmem %s9, 32
        %v1820 = vld [vmem:[%s1819] sm:$0xff]
        %v1821 = vld [vmem:[%s1819 + $0x8] sm:$0xff]
        %v1822 = vld [vmem:[%s1819 + $0x10] sm:$0xff]
        %v1823 = vld [vmem:[%s1819 + $0x18] sm:$0xff]
        %v1825 = vsel %vm1744, %v1736, 0
        %1827 = vmatprep.subr.mxu0 0.0
        %1828 = vmatpush1.msra.mxu0 0.0
        %1829 = vmatprep.subr.mxu0 0.0
        %1830 = vmatpush1.msra.mxu0 0.0
        %1831 = vmatprep.subr.mxu0 0.0
        %1832 = vmatpush1.msra.mxu0 0.0
        %1833 = vmatprep.subr.mxu0 0.0
        %1834 = vmatpush1.msra.mxu0 0.0
        %1835 = vmatprep.subr.mxu0 0.0
        %1836 = vmatpush1.msra.mxu0 0.0
        %1837 = vmatprep.subr.mxu0 0.0
        %1838 = vmatpush1.msra.mxu0 0.0
        %1839 = vmatprep.subr.mxu0 0.0
        %1840 = vmatpush1.msra.mxu0 0.0
        %1841 = vmatprep.subr.mxu0 0.0
        %1842 = vmatpush1.msra.mxu0 0.0
        %1843 = vmatprep.subr.mxu0 0.0
        %1844 = vmatpush1.msra.mxu0 0.0
        %1845 = vmatprep.subr.mxu0 0.0
        %1846 = vmatpush1.msra.mxu0 0.0
        %1847 = vmatprep.subr.mxu0 0.0
        %1848 = vmatpush1.msra.mxu0 0.0
        %1849 = vmatprep.subr.mxu0 0.0
        %1850 = vmatpush1.msra.mxu0 0.0
        %1851 = vmatprep.subr.mxu0 0.0
        %1852 = vmatpush1.msra.mxu0 %v1823
        %1853 = vmatprep.subr.mxu0 0.0
        %1854 = vmatpush1.msra.mxu0 %v1822
        %1855 = vmatprep.subr.mxu0 0.0
        %1856 = vmatpush1.msra.mxu0 %v1821
        %1857 = vmatprep.subr.mxu0 0.0
        %1858 = vmatpush1.msra.mxu0 %v1820
        %1859 = vmatprep.subr.mxu0 0.0
        %1860 = vmatpush2.msra.mxu0 0.0
        %1861 = vmatprep.subr.mxu0 0.0
        %1862 = vmatpush2.msra.mxu0 0.0
        %1863 = vmatprep.subr.mxu0 0.0
        %1864 = vmatpush2.msra.mxu0 0.0
        %1865 = vmatprep.subr.mxu0 0.0
        %1866 = vmatpush2.msra.mxu0 0.0
        %1867 = vmatprep.subr.mxu0 0.0
        %1868 = vmatpush2.msra.mxu0 0.0
        %1869 = vmatprep.subr.mxu0 0.0
        %1870 = vmatpush2.msra.mxu0 0.0
        %1871 = vmatprep.subr.mxu0 0.0
        %1872 = vmatpush2.msra.mxu0 0.0
        %1873 = vmatprep.subr.mxu0 0.0
        %1874 = vmatpush2.msra.mxu0 0.0
        %1875 = vmatprep.subr.mxu0 0.0
        %1876 = vmatpush2.msra.mxu0 0.0
        %1877 = vmatprep.subr.mxu0 0.0
        %1878 = vmatpush2.msra.mxu0 0.0
        %1879 = vmatprep.subr.mxu0 0.0
        %1880 = vmatpush2.msra.mxu0 0.0
        %1881 = vmatprep.subr.mxu0 0.0
        %1882 = vmatpush2.msra.mxu0 0.0
        %1883 = vmatprep.subr.mxu0 0.0
        %1884 = vmatpush2.msra.mxu0 0.0
        %1885 = vmatprep.subr.mxu0 0.0
        %1886 = vmatpush2.msra.mxu0 0.0
        %1887 = vmatprep.subr.mxu0 0.0
        %1888 = vmatpush2.msra.mxu0 0.0
        %1889 = vmatprep.subr.mxu0 0.0
        %1890 = vmatpush2.msra.mxu0 0.0
        %1891 = vmatprep.mubr.f32.mxu0 0.0
        %1892 = vmatmul.mubr.f32.gmra.mxu0 %v1825
        %v1893 = vpop.f32.mrf.mxu0
        %v1894 = vadd.f32 0.0, %v1893
        %v1895 = vpop.f32.mrf.mxu0
        %1896 = vdwg.mxu0
        %v1897 = vadd.f32 %v1818, %v1894
        %s1898 = scalar_lea.vmem %s9, 64
        %v1899 = vld [vmem:[%s1898] sm:$0xff]
        %v1900 = vld [vmem:[%s1898 + $0x8] sm:$0xff]
        %v1901 = vld [vmem:[%s1898 + $0x10] sm:$0xff]
        %v1902 = vld [vmem:[%s1898 + $0x18] sm:$0xff]
        %v1904 = vsel %vm1744, %v1737, 0
        %1906 = vmatprep.subr.mxu0 0.0
        %1907 = vmatpush1.msra.mxu0 0.0
        %1908 = vmatprep.subr.mxu0 0.0
        %1909 = vmatpush1.msra.mxu0 0.0
        %1910 = vmatprep.subr.mxu0 0.0
        %1911 = vmatpush1.msra.mxu0 0.0
        %1912 = vmatprep.subr.mxu0 0.0
        %1913 = vmatpush1.msra.mxu0 0.0
        %1914 = vmatprep.subr.mxu0 0.0
        %1915 = vmatpush1.msra.mxu0 0.0
        %1916 = vmatprep.subr.mxu0 0.0
        %1917 = vmatpush1.msra.mxu0 0.0
        %1918 = vmatprep.subr.mxu0 0.0
        %1919 = vmatpush1.msra.mxu0 0.0
        %1920 = vmatprep.subr.mxu0 0.0
        %1921 = vmatpush1.msra.mxu0 0.0
        %1922 = vmatprep.subr.mxu0 0.0
        %1923 = vmatpush1.msra.mxu0 0.0
        %1924 = vmatprep.subr.mxu0 0.0
        %1925 = vmatpush1.msra.mxu0 0.0
        %1926 = vmatprep.subr.mxu0 0.0
        %1927 = vmatpush1.msra.mxu0 0.0
        %1928 = vmatprep.subr.mxu0 0.0
        %1929 = vmatpush1.msra.mxu0 0.0
        %1930 = vmatprep.subr.mxu0 0.0
        %1931 = vmatpush1.msra.mxu0 %v1902
        %1932 = vmatprep.subr.mxu0 0.0
        %1933 = vmatpush1.msra.mxu0 %v1901
        %1934 = vmatprep.subr.mxu0 0.0
        %1935 = vmatpush1.msra.mxu0 %v1900
        %1936 = vmatprep.subr.mxu0 0.0
        %1937 = vmatpush1.msra.mxu0 %v1899
        %1938 = vmatprep.subr.mxu0 0.0
        %1939 = vmatpush2.msra.mxu0 0.0
        %1940 = vmatprep.subr.mxu0 0.0
        %1941 = vmatpush2.msra.mxu0 0.0
        %1942 = vmatprep.subr.mxu0 0.0
        %1943 = vmatpush2.msra.mxu0 0.0
        %1944 = vmatprep.subr.mxu0 0.0
        %1945 = vmatpush2.msra.mxu0 0.0
        %1946 = vmatprep.subr.mxu0 0.0
        %1947 = vmatpush2.msra.mxu0 0.0
        %1948 = vmatprep.subr.mxu0 0.0
        %1949 = vmatpush2.msra.mxu0 0.0
        %1950 = vmatprep.subr.mxu0 0.0
        %1951 = vmatpush2.msra.mxu0 0.0
        %1952 = vmatprep.subr.mxu0 0.0
        %1953 = vmatpush2.msra.mxu0 0.0
        %1954 = vmatprep.subr.mxu0 0.0
        %1955 = vmatpush2.msra.mxu0 0.0
        %1956 = vmatprep.subr.mxu0 0.0
        %1957 = vmatpush2.msra.mxu0 0.0
        %1958 = vmatprep.subr.mxu0 0.0
        %1959 = vmatpush2.msra.mxu0 0.0
        %1960 = vmatprep.subr.mxu0 0.0
        %1961 = vmatpush2.msra.mxu0 0.0
        %1962 = vmatprep.subr.mxu0 0.0
        %1963 = vmatpush2.msra.mxu0 0.0
        %1964 = vmatprep.subr.mxu0 0.0
        %1965 = vmatpush2.msra.mxu0 0.0
        %1966 = vmatprep.subr.mxu0 0.0
        %1967 = vmatpush2.msra.mxu0 0.0
        %1968 = vmatprep.subr.mxu0 0.0
        %1969 = vmatpush2.msra.mxu0 0.0
        %1970 = vmatprep.mubr.f32.mxu0 0.0
        %1971 = vmatmul.mubr.f32.gmra.mxu0 %v1904
        %v1972 = vpop.f32.mrf.mxu0
        %v1973 = vadd.f32 0.0, %v1972
        %v1974 = vpop.f32.mrf.mxu0
        %1975 = vdwg.mxu0
        %v1976 = vadd.f32 %v1897, %v1973
        %s1977 = scalar_lea.vmem %s9, 96
        %v1978 = vld [vmem:[%s1977] sm:$0xff]
        %v1979 = vld [vmem:[%s1977 + $0x8] sm:$0xff]
        %v1980 = vld [vmem:[%s1977 + $0x10] sm:$0xff]
        %v1981 = vld [vmem:[%s1977 + $0x18] sm:$0xff]
        %v1983 = vsel %vm1744, %v1738, 0
        %1985 = vmatprep.subr.mxu0 0.0
        %1986 = vmatpush1.msra.mxu0 0.0
        %1987 = vmatprep.subr.mxu0 0.0
        %1988 = vmatpush1.msra.mxu0 0.0
        %1989 = vmatprep.subr.mxu0 0.0
        %1990 = vmatpush1.msra.mxu0 0.0
        %1991 = vmatprep.subr.mxu0 0.0
        %1992 = vmatpush1.msra.mxu0 0.0
        %1993 = vmatprep.subr.mxu0 0.0
        %1994 = vmatpush1.msra.mxu0 0.0
        %1995 = vmatprep.subr.mxu0 0.0
        %1996 = vmatpush1.msra.mxu0 0.0
        %1997 = vmatprep.subr.mxu0 0.0
        %1998 = vmatpush1.msra.mxu0 0.0
        %1999 = vmatprep.subr.mxu0 0.0
        %2000 = vmatpush1.msra.mxu0 0.0
        %2001 = vmatprep.subr.mxu0 0.0
        %2002 = vmatpush1.msra.mxu0 0.0
        %2003 = vmatprep.subr.mxu0 0.0
        %2004 = vmatpush1.msra.mxu0 0.0
        %2005 = vmatprep.subr.mxu0 0.0
        %2006 = vmatpush1.msra.mxu0 0.0
        %2007 = vmatprep.subr.mxu0 0.0
        %2008 = vmatpush1.msra.mxu0 0.0
        %2009 = vmatprep.subr.mxu0 0.0
        %2010 = vmatpush1.msra.mxu0 %v1981
        %2011 = vmatprep.subr.mxu0 0.0
        %2012 = vmatpush1.msra.mxu0 %v1980
        %2013 = vmatprep.subr.mxu0 0.0
        %2014 = vmatpush1.msra.mxu0 %v1979
        %2015 = vmatprep.subr.mxu0 0.0
        %2016 = vmatpush1.msra.mxu0 %v1978
        %2017 = vmatprep.subr.mxu0 0.0
        %2018 = vmatpush2.msra.mxu0 0.0
        %2019 = vmatprep.subr.mxu0 0.0
        %2020 = vmatpush2.msra.mxu0 0.0
        %2021 = vmatprep.subr.mxu0 0.0
        %2022 = vmatpush2.msra.mxu0 0.0
        %2023 = vmatprep.subr.mxu0 0.0
        %2024 = vmatpush2.msra.mxu0 0.0
        %2025 = vmatprep.subr.mxu0 0.0
        %2026 = vmatpush2.msra.mxu0 0.0
        %2027 = vmatprep.subr.mxu0 0.0
        %2028 = vmatpush2.msra.mxu0 0.0
        %2029 = vmatprep.subr.mxu0 0.0
        %2030 = vmatpush2.msra.mxu0 0.0
        %2031 = vmatprep.subr.mxu0 0.0
        %2032 = vmatpush2.msra.mxu0 0.0
        %2033 = vmatprep.subr.mxu0 0.0
        %2034 = vmatpush2.msra.mxu0 0.0
        %2035 = vmatprep.subr.mxu0 0.0
        %2036 = vmatpush2.msra.mxu0 0.0
        %2037 = vmatprep.subr.mxu0 0.0
        %2038 = vmatpush2.msra.mxu0 0.0
        %2039 = vmatprep.subr.mxu0 0.0
        %2040 = vmatpush2.msra.mxu0 0.0
        %2041 = vmatprep.subr.mxu0 0.0
        %2042 = vmatpush2.msra.mxu0 0.0
        %2043 = vmatprep.subr.mxu0 0.0
        %2044 = vmatpush2.msra.mxu0 0.0
        %2045 = vmatprep.subr.mxu0 0.0
        %2046 = vmatpush2.msra.mxu0 0.0
        %2047 = vmatprep.subr.mxu0 0.0
        %2048 = vmatpush2.msra.mxu0 0.0
        %2049 = vmatprep.mubr.f32.mxu0 0.0
        %2050 = vmatmul.mubr.f32.gmra.mxu0 %v1983
        %v2051 = vpop.f32.mrf.mxu0
        %v2052 = vadd.f32 0.0, %v2051
        %v2053 = vpop.f32.mrf.mxu0
        %2054 = vdwg.mxu0
        %v2055 = vadd.f32 %v1976, %v2052
        %vm2056 = vcmask 16384
        %2057 = vst.msk [vmem:[%s422] sm:$0x1] %vm2056, %v2055
        %s2058 = sand.u32 %s271, 1
        %s2059 = scalar_lea.sflag [#allocation4], %s2058
        %s2060 = sand.u32 %s271, 1
        %s2061 = scalar_lea.vmem [#allocation8], %s2060
        // Predicated region
        $region77: #{tinyvgg_forward.1} parent=63 // pred_check
          %p2062 = pneg %p281
        $region78: #{tinyvgg_forward.1} parent=63 // pred_check_branch
          %2064 = sbr.rel (%p2062) target = $region80
        $region79: #{tinyvgg_forward.1} parent=63 // pred_region
          %s2066 = ssub.s32 16, 16
          %2067 = vsyncadd %s2059, %s2066
          %s2068 = smul.addr %s27, 16
          %s2069 = scalar_lea.hbm %s11, %s2068
          %s2071 = sshll.u32 %s2061, 4
          %s2072 = int_to_ptr.vmem [resolvable:$true] %s2071
          %2074 = dma.vmem_to_hbm [thread:$0]  %s2072, 16, %s2069, %s2059
        $region80: #{tinyvgg_forward.1} parent=63 // pred_fallthru
          _
      $region64: #{tinyvgg_forward.1} parent=5 // pred_fallthru
        _
      %p2075 = scmp.le.s32.totalorder 2, %s22
      // Predicated region
      $region81: #{tinyvgg_forward.1} parent=5 // pred_check
        %p2076 = pneg %p2075
      $region82: #{tinyvgg_forward.1} parent=5 // pred_check_branch
        %2078 = sbr.rel (%p2076) target = $region84
      $region83: #{tinyvgg_forward.1} parent=5 // pred_region
        %s2079 = ssub.s32 %s22, 2
        // Predicated region
        $region85: #{tinyvgg_forward.1} parent=83 // pred_check
          %p2080 = pneg %p287
        $region86: #{tinyvgg_forward.1} parent=83 // pred_check_branch
          %2082 = sbr.rel (%p2080) target = $region88
        $region87: #{tinyvgg_forward.1} parent=83 // pred_region
          %s2083 = sand.u32 %s272, 1
          %s2084 = scalar_lea.sflag [#allocation4], %s2083
          %s2085 = sand.u32 %s272, 1
          %s2086 = scalar_lea.vmem [#allocation8], %s2085
          %2087 = dma.done %s2084, 16
        $region88: #{tinyvgg_forward.1} parent=83 // pred_fallthru
          _
      $region84: #{tinyvgg_forward.1} parent=5 // pred_fallthru
        _
    $region6: #{tinyvgg_forward.1} parent=1 // loop_footer
      %s26 = sadd.s32 1, %s22
    $region7: #{tinyvgg_forward.1} parent=1 // loop_footer_branch
      %21 = sbr.rel target = $region3
    $region8: #{tinyvgg_forward.1} parent=1 // loop_exit
      _
    %2088 = vsyncpa [#allocation3], 1
    %s2089 = scalar_lea.sflag [#allocation3], 1
    %2090 = vsyncpa %s2089, 1
    %2091 = vsyncpa [#allocation6], 1
    %2092 = vsyncpa [#allocation4], 1
    %s2093 = scalar_lea.sflag [#allocation4], 1
    %2094 = vsyncpa %s2093, 1

</llo_original>
